<compile_context>
chip_gen: v7x
topology: tpu7x:2x2x1
jax: 0.10.0
libtpu: 0.0.40
codegen_flags: <defaults>
</compile_context>

<pallas_src>
import jax
import jax.numpy as jnp
from jax.experimental import pallas as pl
from jax.experimental.pallas import tpu as pltpu

_LANE = 128
_SUBLANE = 8


def _round_up(n, m):
    return ((n + m - 1) // m) * m


def _choose_tile_b(batch, max_tile=512):
    """Balanced batch tiles; try to expose >=2 programs for v7x megacore."""
    n_tiles = max(1, -(-batch // max_tile))
    tile_b = _round_up(max(1, -(-batch // n_tiles)), _SUBLANE)
    # If there is only one program but the tile can still be split, halve it so
    # the "parallel" batch axis can be sharded across v7x's 2 TensorCores
    # (costless on v5e/v6e, which have a single TC).
    if _round_up(batch, tile_b) // tile_b < 2 and tile_b >= 2 * _SUBLANE:
        tile_b = _round_up(-(-tile_b // 2), _SUBLANE)
    b_pad = _round_up(batch, tile_b)
    return tile_b, b_pad


def _ugru_kernel(x_ref, h_ref, wgx_ref, wgh_ref, bg_ref,
                 wtx_ref, wtrh_ref, bt_ref, out_ref):
    """One batch tile. x/h are zero-padded & lane-aligned; gates are Hp wide."""
    hp = out_ref.shape[-1]
    mm_dtype = wgx_ref.dtype                       # f32 or bf16 MXU input dtype

    x = x_ref[...]                                 # (TB, Inp) f32
    h = h_ref[...]                                 # (TB, Hp)  f32
    x_mm = x.astype(mm_dtype)                      # cast once, reused by 2 dots
    h_mm = h.astype(mm_dtype)

    # Fused gate pre-activations, columns ordered [r | z | i], each Hp lanes.
    g = (jnp.dot(x_mm, wgx_ref[...], preferred_element_type=jnp.float32)
         + jnp.dot(h_mm, wgh_ref[...], preferred_element_type=jnp.float32)
         + bg_ref[...])
    gates = jax.nn.sigmoid(g)                      # one contiguous EUP stream
    r = gates[:, 0 * hp:1 * hp]                    # lane-aligned slices
    z = gates[:, 1 * hp:2 * hp]
    i = gates[:, 2 * hp:3 * hp]

    # htilde pre-activation: x@Wt_x (independent of r -> overlaps gate matmul)
    # + (r*h)@Wt_rh, bias = bx3 + brh.  No concat, no extra VMEM copy.
    t = (jnp.dot(x_mm, wtx_ref[...], preferred_element_type=jnp.float32)
         + jnp.dot((r * h).astype(mm_dtype), wtrh_ref[...],
                   preferred_element_type=jnp.float32)
         + bt_ref[...])
    htilde = jnp.tanh(t)

    out_ref[...] = z * h + i * htilde              # hdot, lane-dense store


def prepare_ugru_params(params, input_size, hidden_size,
                        weight_dtype=jnp.bfloat16):
    """Fuse / transpose / pad the 8 nn.Linear layers ONCE (hoisted out of step).

    Gate matmul is split into an x-part and an h-part (so x and h stay separate
    inputs); likewise the htilde matmul is split into Wt_x and Wt_rh.
    """
    inp = _round_up(max(input_size, 1), _LANE)
    hp = _round_up(max(hidden_size, 1), _LANE)

    def w_t(name):  # nn.Linear weight is (out, in) -> (in, out)
        return params[name][0].T

    def b(name):
        return params[name][1]

    # Gate matmuls: columns = gate blocks [r | z | i], each Hp wide.
    wgx = jnp.zeros((inp, 3 * hp), jnp.float32)
    wgh = jnp.zeros((hp, 3 * hp), jnp.float32)
    bg = jnp.zeros((1, 3 * hp), jnp.float32)
    for g_idx, (xk, hk) in enumerate((("fc_x1", "fc_h1"),
                                      ("fc_x2", "fc_h2"),
                                      ("fc_x4", "fc_h4"))):
        c0 = g_idx * hp
        wgx = wgx.at[:input_size, c0:c0 + hidden_size].set(w_t(xk))
        wgh = wgh.at[:hidden_size, c0:c0 + hidden_size].set(w_t(hk))
        bg = bg.at[0, c0:c0 + hidden_size].set(b(xk) + b(hk))

    # htilde matmul, split: x rows and (r*h) rows; bias = bx3 + brh.
    wtx = jnp.zeros((inp, hp), jnp.float32)
    wtrh = jnp.zeros((hp, hp), jnp.float32)
    bt = jnp.zeros((1, hp), jnp.float32)
    wtx = wtx.at[:input_size, :hidden_size].set(w_t("fc_x3"))
    wtrh = wtrh.at[:hidden_size, :hidden_size].set(w_t("fc_rh"))
    bt = bt.at[0, :hidden_size].set(b("fc_x3") + b("fc_rh"))

    return dict(
        wgx=wgx.astype(weight_dtype), wgh=wgh.astype(weight_dtype), bg=bg,
        wtx=wtx.astype(weight_dtype), wtrh=wtrh.astype(weight_dtype), bt=bt,
        input_size=input_size, hidden_size=hidden_size, inp=inp, hp=hp,
    )


def _build_ugru_call(tile_b, b_pad, inp, hp, vmem_limit, weight_mode):
    grid = (b_pad // tile_b,)

    def resident(shape):  # constant-index weight/bias blocks (stay in VMEM)
        return pl.BlockSpec(shape, lambda b: (0, 0), pipeline_mode=weight_mode)

    return pl.pallas_call(
        _ugru_kernel,
        out_shape=jax.ShapeDtypeStruct((b_pad, hp), jnp.float32),
        grid_spec=pltpu.PrefetchScalarGridSpec(
            num_scalar_prefetch=0,
            grid=grid,
            in_specs=[
                pl.BlockSpec((tile_b, inp), lambda b: (b, 0)),   # x tile
                pl.BlockSpec((tile_b, hp), lambda b: (b, 0)),    # h tile
                resident((inp, 3 * hp)),                         # Wg_x
                resident((hp, 3 * hp)),                          # Wg_h
                resident((1, 3 * hp)),                           # bg
                resident((inp, hp)),                             # Wt_x
                resident((hp, hp)),                              # Wt_rh
                resident((1, hp)),                               # bt
            ],
            out_specs=pl.BlockSpec((tile_b, hp), lambda b: (b, 0)),
        ),
        compiler_params=pltpu.CompilerParams(
            dimension_semantics=("parallel",),      # megacore-shardable batch axis
            vmem_limit_bytes=int(vmem_limit),
        ),
    )


def my_ugru_cell(x, h, fused, *, max_tile_b=512):
    """UGRU cell forward: two fused (split) matmuls + gate math in one Pallas call."""
    B = x.shape[0]
    in_size, hidden = fused["input_size"], fused["hidden_size"]
    inp, hp = fused["inp"], fused["hp"]

    tile_b, b_pad = _choose_tile_b(B, max_tile_b)

    # TODO(synk): when stepping this cell in a lax.scan over time, hoist these
    # pads out of the loop (pad the whole (T, B, IN) sequence once), keep h in
    # its padded (b_pad, Hp) layout between steps aliased to the output via
    # input_output_aliases, and fold T into the grid ("arbitrary") so the
    # resident weights are DMA'd once for the whole sequence, not per step.
    x_p = jnp.pad(x.astype(jnp.float32), ((0, b_pad - B), (0, inp - in_size)))
    h_p = jnp.pad(h.astype(jnp.float32), ((0, b_pad - B), (0, hp - hidden)))

    weights = (fused["wgx"], fused["wgh"], fused["bg"],
               fused["wtx"], fused["wtrh"], fused["bt"])

    # VMEM budget: single-buffered resident weights + double-buffered activation
    # tiles + elementwise temporaries, capped by the queried VMEM capacity.
    w_bytes = sum(int(a.size) * a.dtype.itemsize for a in weights)
    act_bytes = 2 * 2 * tile_b * (inp + 2 * hp) * 4   # x, h in + out, 2 buffers
    tmp_bytes = tile_b * (8 * hp) * 4                 # g slab, gates, r*h, t, ...
    vmem_want = w_bytes + act_bytes + tmp_bytes + (4 << 20)
    try:
        vmem_cap = int(0.9 * pltpu.get_tpu_info().vmem_capacity_bytes)
    except Exception:
        vmem_cap = int(0.9 * (64 << 20))              # conservative v7x per-TC VMEM
    vmem_limit = min(max(vmem_want, 32 << 20), vmem_cap)

    # TODO(synk): for very large hidden sizes where even bf16 weights exceed the
    # VMEM cap, add a gate-column / K tiling grid axis ("arbitrary") that streams
    # weight blocks with an f32 accumulator scratch instead of full residency.

    def run(weight_mode):
        call = _build_ugru_call(tile_b, b_pad, inp, hp, vmem_limit, weight_mode)
        return call(x_p, h_p, *weights)

    try:
        # Constant-index weight blocks: single-buffer them (halves weight VMEM).
        out = run(pl.Buffered(1))
    except Exception:
        # Fallback: default double-buffering if Buffered(1) is not supported.
        out = run(None)

    return out[:B, :hidden]


# ----------------------------------------------------------------------------
# Test harness
# ----------------------------------------------------------------------------
def _init_linear(key, in_features, out_features):
    """Deterministic init mimicking nn.Linear default (uniform +-1/sqrt(in))."""
    kw, kb = jax.random.split(key)
    bound = 1.0 / jnp.sqrt(jnp.float32(in_features))
    w = jax.random.uniform(kw, (out_features, in_features), jnp.float32,
                           -bound, bound)
    b = jax.random.uniform(kb, (out_features,), jnp.float32, -bound, bound)
    return w, b


def _reference(x, h, params):
    """Pure-JAX reference of the PyTorch forward."""
    def lin(name, v):
        w, b = params[name]
        return v @ w.T + b
    r = jax.nn.sigmoid(lin("fc_x1", x) + lin("fc_h1", h))
    z = jax.nn.sigmoid(lin("fc_x2", x) + lin("fc_h2", h))
    i = jax.nn.sigmoid(lin("fc_x4", x) + lin("fc_h4", h))
    htilde = jnp.tanh(lin("fc_x3", x) + lin("fc_rh", r * h))
    return z * h + i * htilde


if __name__ == "__main__":
    # Small, deliberately non-aligned shapes to exercise the padding paths.
    B, IN, H = 4, 20, 48
    key = jax.random.PRNGKey(0)
    keys = jax.random.split(key, 12)

    params = {
        "fc_x1": _init_linear(keys[0], IN, H),
        "fc_x2": _init_linear(keys[1], IN, H),
        "fc_x3": _init_linear(keys[2], IN, H),
        "fc_x4": _init_linear(keys[3], IN, H),
        "fc_h1": _init_linear(keys[4], H, H),
        "fc_h2": _init_linear(keys[5], H, H),
        "fc_h4": _init_linear(keys[6], H, H),
        "fc_rh": _init_linear(keys[7], H, H),
    }
    x = jax.random.normal(keys[8], (B, IN), jnp.float32)
    h = jax.random.normal(keys[9], (B, H), jnp.float32)
    ref = _reference(x, h, params)

    # f32 weights: strict tolerance.
    fused_f32 = prepare_ugru_params(params, IN, H, weight_dtype=jnp.float32)
    out = jax.block_until_ready(my_ugru_cell(x, h, fused_f32))
    assert out.shape == (B, H)
    err = float(jnp.max(jnp.abs(out - ref)))
    assert jnp.allclose(out, ref, atol=1e-4, rtol=1e-4), \
        f"f32 mismatch vs reference (max abs err {err})"

    # Default bf16 weights (halved weight VMEM/DMA, f32 accumulation): looser tol.
    fused_bf16 = prepare_ugru_params(params, IN, H)
    out_bf = jax.block_until_ready(my_ugru_cell(x, h, fused_bf16))
    err_bf = float(jnp.max(jnp.abs(out_bf - ref)))
    assert jnp.allclose(out_bf, ref, atol=5e-2, rtol=5e-2), \
        f"bf16 mismatch vs reference (max abs err {err_bf})"

    # Multi-tile grid path (exercises pipelining + padded batch rows).
    B2 = 20
    x2 = jax.random.normal(keys[10], (B2, IN), jnp.float32)
    h2 = jax.random.normal(keys[11], (B2, H), jnp.float32)
    out2 = jax.block_until_ready(my_ugru_cell(x2, h2, fused_f32, max_tile_b=8))
    ref2 = _reference(x2, h2, params)
    err2 = float(jnp.max(jnp.abs(out2 - ref2)))
    assert jnp.allclose(out2, ref2, atol=1e-4, rtol=1e-4), \
        f"multi-tile mismatch vs reference (max abs err {err2})"

    print("KERNEL_OK")
</pallas_src>

<mosaic_0001>
module attributes {stable_mosaic.version = 11 : i64} {
  func.func @_ugru_kernel(%arg0: i32, %arg1: memref<8x128xf32, #tpu.memory_space<vmem>>, %arg2: memref<8x128xf32, #tpu.memory_space<vmem>>, %arg3: memref<128x384xf32, #tpu.memory_space<vmem>>, %arg4: memref<128x384xf32, #tpu.memory_space<vmem>>, %arg5: memref<1x384xf32, #tpu.memory_space<vmem>>, %arg6: memref<128x128xf32, #tpu.memory_space<vmem>>, %arg7: memref<128x128xf32, #tpu.memory_space<vmem>>, %arg8: memref<1x128xf32, #tpu.memory_space<vmem>>, %arg9: memref<8x128xf32, #tpu.memory_space<vmem>>) attributes {dimension_semantics = [#tpu.dimension_semantics<parallel>], iteration_bounds = array<i64: 1>, scalar_prefetch = 0 : i64, scratch_operands = 0 : i64, tpu.core_type = #tpu.core_type<tc>, window_params = [{transform_indices = @transform_0, window_bounds = array<i64: 8, 128>}, {transform_indices = @transform_1, window_bounds = array<i64: 8, 128>}, {pipeline_mode = #tpu.pipeline_mode<synchronous>, transform_indices = @transform_2, window_bounds = array<i64: 128, 384>}, {pipeline_mode = #tpu.pipeline_mode<synchronous>, transform_indices = @transform_3, window_bounds = array<i64: 128, 384>}, {pipeline_mode = #tpu.pipeline_mode<synchronous>, transform_indices = @transform_4, window_bounds = array<i64: 1, 384>}, {pipeline_mode = #tpu.pipeline_mode<synchronous>, transform_indices = @transform_5, window_bounds = array<i64: 128, 128>}, {pipeline_mode = #tpu.pipeline_mode<synchronous>, transform_indices = @transform_6, window_bounds = array<i64: 128, 128>}, {pipeline_mode = #tpu.pipeline_mode<synchronous>, transform_indices = @transform_7, window_bounds = array<i64: 1, 128>}, {transform_indices = @transform_8, window_bounds = array<i64: 8, 128>}]} {
    %c0 = arith.constant 0 : index
    %c0_0 = arith.constant 0 : index
    %0 = vector.load %arg1[%c0, %c0_0] : memref<8x128xf32, #tpu.memory_space<vmem>>, vector<8x128xf32>
    %c0_1 = arith.constant 0 : index
    %c0_2 = arith.constant 0 : index
    %1 = vector.load %arg2[%c0_1, %c0_2] : memref<8x128xf32, #tpu.memory_space<vmem>>, vector<8x128xf32>
    %c0_3 = arith.constant 0 : index
    %c0_4 = arith.constant 0 : index
    %2 = vector.load %arg3[%c0_3, %c0_4] : memref<128x384xf32, #tpu.memory_space<vmem>>, vector<128x384xf32>
    %cst = arith.constant dense<0.000000e+00> : vector<8x384xf32>
    %3 = tpu.matmul %0, %2, %cst {dimension_numbers = #tpu.dot_dimension_numbers<[1], [0], [0], [1], [0, 0, 1, 1], [], []>} : vector<8x128xf32>, vector<128x384xf32>, vector<8x384xf32> -> vector<8x384xf32>
    %c0_5 = arith.constant 0 : index
    %c0_6 = arith.constant 0 : index
    %4 = vector.load %arg4[%c0_5, %c0_6] : memref<128x384xf32, #tpu.memory_space<vmem>>, vector<128x384xf32>
    %cst_7 = arith.constant dense<0.000000e+00> : vector<8x384xf32>
    %5 = tpu.matmul %1, %4, %cst_7 {dimension_numbers = #tpu.dot_dimension_numbers<[1], [0], [0], [1], [0, 0, 1, 1], [], []>} : vector<8x128xf32>, vector<128x384xf32>, vector<8x384xf32> -> vector<8x384xf32>
    %6 = arith.addf %3, %5 : vector<8x384xf32>
    %c0_8 = arith.constant 0 : index
    %c0_9 = arith.constant 0 : index
    %7 = vector.load %arg5[%c0_8, %c0_9] : memref<1x384xf32, #tpu.memory_space<vmem>>, vector<1x384xf32>
    %8 = vector.broadcast %7 : vector<1x384xf32> to vector<8x384xf32>
    %9 = arith.addf %6, %8 : vector<8x384xf32>
    %10 = arith.negf %9 : vector<8x384xf32>
    %11 = math.exp %10 : vector<8x384xf32>
    %cst_10 = arith.constant 1.000000e+00 : f32
    %12 = vector.broadcast %cst_10 : f32 to vector<8x384xf32>
    %13 = arith.addf %12, %11 : vector<8x384xf32>
    %14 = arith.divf %12, %13 : vector<8x384xf32>
    %15 = vector.extract_strided_slice %14 {offsets = [0, 0], sizes = [8, 128], strides = [1, 1]} : vector<8x384xf32> to vector<8x128xf32>
    %16 = vector.extract_strided_slice %14 {offsets = [0, 128], sizes = [8, 128], strides = [1, 1]} : vector<8x384xf32> to vector<8x128xf32>
    %17 = vector.extract_strided_slice %14 {offsets = [0, 256], sizes = [8, 128], strides = [1, 1]} : vector<8x384xf32> to vector<8x128xf32>
    %c0_11 = arith.constant 0 : index
    %c0_12 = arith.constant 0 : index
    %18 = vector.load %arg6[%c0_11, %c0_12] : memref<128x128xf32, #tpu.memory_space<vmem>>, vector<128x128xf32>
    %cst_13 = arith.constant dense<0.000000e+00> : vector<8x128xf32>
    %19 = tpu.matmul %0, %18, %cst_13 {dimension_numbers = #tpu.dot_dimension_numbers<[1], [0], [0], [1], [0, 0, 1, 1], [], []>} : vector<8x128xf32>, vector<128x128xf32>, vector<8x128xf32> -> vector<8x128xf32>
    %20 = arith.mulf %15, %1 : vector<8x128xf32>
    %c0_14 = arith.constant 0 : index
    %c0_15 = arith.constant 0 : index
    %21 = vector.load %arg7[%c0_14, %c0_15] : memref<128x128xf32, #tpu.memory_space<vmem>>, vector<128x128xf32>
    %cst_16 = arith.constant dense<0.000000e+00> : vector<8x128xf32>
    %22 = tpu.matmul %20, %21, %cst_16 {dimension_numbers = #tpu.dot_dimension_numbers<[1], [0], [0], [1], [0, 0, 1, 1], [], []>} : vector<8x128xf32>, vector<128x128xf32>, vector<8x128xf32> -> vector<8x128xf32>
    %23 = arith.addf %19, %22 : vector<8x128xf32>
    %c0_17 = arith.constant 0 : index
    %c0_18 = arith.constant 0 : index
    %24 = vector.load %arg8[%c0_17, %c0_18] : memref<1x128xf32, #tpu.memory_space<vmem>>, vector<1x128xf32>
    %25 = vector.broadcast %24 : vector<1x128xf32> to vector<8x128xf32>
    %26 = arith.addf %23, %25 : vector<8x128xf32>
    %27 = math.tanh %26 : vector<8x128xf32>
    %28 = arith.mulf %16, %1 : vector<8x128xf32>
    %29 = arith.mulf %17, %27 : vector<8x128xf32>
    %30 = arith.addf %28, %29 : vector<8x128xf32>
    %c0_19 = arith.constant 0 : index
    %c0_20 = arith.constant 0 : index
    %31 = vector.load %arg9[%c0_19, %c0_20] : memref<8x128xf32, #tpu.memory_space<vmem>>, vector<8x128xf32>
    tpu.vector_store %arg9[%c0_19, %c0_20], %30 {strides = array<i32>} : memref<8x128xf32, #tpu.memory_space<vmem>>, vector<8x128xf32>,
    return
  }
  func.func @transform_0(%arg0: i32) -> (i32, i32) {
    %c0_i32 = arith.constant 0 : i32
    %c0_i32_0 = arith.constant 0 : i32
    return %arg0, %c0_i32 : i32, i32
  }
  func.func @transform_1(%arg0: i32) -> (i32, i32) {
    %c0_i32 = arith.constant 0 : i32
    %c0_i32_0 = arith.constant 0 : i32
    return %arg0, %c0_i32 : i32, i32
  }
  func.func @transform_2(%arg0: i32) -> (i32, i32) {
    %c0_i32 = arith.constant 0 : i32
    %c0_i32_0 = arith.constant 0 : i32
    %c0_i32_1 = arith.constant 0 : i32
    return %c0_i32, %c0_i32_0 : i32, i32
  }
  func.func @transform_3(%arg0: i32) -> (i32, i32) {
    %c0_i32 = arith.constant 0 : i32
    %c0_i32_0 = arith.constant 0 : i32
    %c0_i32_1 = arith.constant 0 : i32
    return %c0_i32, %c0_i32_0 : i32, i32
  }
  func.func @transform_4(%arg0: i32) -> (i32, i32) {
    %c0_i32 = arith.constant 0 : i32
    %c0_i32_0 = arith.constant 0 : i32
    %c0_i32_1 = arith.constant 0 : i32
    return %c0_i32, %c0_i32_0 : i32, i32
  }
  func.func @transform_5(%arg0: i32) -> (i32, i32) {
    %c0_i32 = arith.constant 0 : i32
    %c0_i32_0 = arith.constant 0 : i32
    %c0_i32_1 = arith.constant 0 : i32
    return %c0_i32, %c0_i32_0 : i32, i32
  }
  func.func @transform_6(%arg0: i32) -> (i32, i32) {
    %c0_i32 = arith.constant 0 : i32
    %c0_i32_0 = arith.constant 0 : i32
    %c0_i32_1 = arith.constant 0 : i32
    return %c0_i32, %c0_i32_0 : i32, i32
  }
  func.func @transform_7(%arg0: i32) -> (i32, i32) {
    %c0_i32 = arith.constant 0 : i32
    %c0_i32_0 = arith.constant 0 : i32
    %c0_i32_1 = arith.constant 0 : i32
    return %c0_i32, %c0_i32_0 : i32, i32
  }
  func.func @transform_8(%arg0: i32) -> (i32, i32) {
    %c0_i32 = arith.constant 0 : i32
    %c0_i32_0 = arith.constant 0 : i32
    return %arg0, %c0_i32 : i32, i32
  }
}

module attributes {stable_mosaic.version = 11 : i64} {
  func.func @_ugru_kernel(%arg0: i32, %arg1: memref<8x128xf32, #tpu.memory_space<vmem>>, %arg2: memref<8x128xf32, #tpu.memory_space<vmem>>, %arg3: memref<128x384xf32, #tpu.memory_space<vmem>>, %arg4: memref<128x384xf32, #tpu.memory_space<vmem>>, %arg5: memref<1x384xf32, #tpu.memory_space<vmem>>, %arg6: memref<128x128xf32, #tpu.memory_space<vmem>>, %arg7: memref<128x128xf32, #tpu.memory_space<vmem>>, %arg8: memref<1x128xf32, #tpu.memory_space<vmem>>, %arg9: memref<8x128xf32, #tpu.memory_space<vmem>>) attributes {dimension_semantics = [#tpu.dimension_semantics<parallel>], iteration_bounds = array<i64: 1>, scalar_prefetch = 0 : i64, scratch_operands = 0 : i64, tpu.core_type = #tpu.core_type<tc>, window_params = [{transform_indices = @transform_0, window_bounds = array<i64: 8, 128>}, {transform_indices = @transform_1, window_bounds = array<i64: 8, 128>}, {pipeline_mode = #tpu.pipeline_mode<synchronous>, transform_indices = @transform_2, window_bounds = array<i64: 128, 384>}, {pipeline_mode = #tpu.pipeline_mode<synchronous>, transform_indices = @transform_3, window_bounds = array<i64: 128, 384>}, {pipeline_mode = #tpu.pipeline_mode<synchronous>, transform_indices = @transform_4, window_bounds = array<i64: 1, 384>}, {pipeline_mode = #tpu.pipeline_mode<synchronous>, transform_indices = @transform_5, window_bounds = array<i64: 128, 128>}, {pipeline_mode = #tpu.pipeline_mode<synchronous>, transform_indices = @transform_6, window_bounds = array<i64: 128, 128>}, {pipeline_mode = #tpu.pipeline_mode<synchronous>, transform_indices = @transform_7, window_bounds = array<i64: 1, 128>}, {transform_indices = @transform_8, window_bounds = array<i64: 8, 128>}]} {
    %c0 = arith.constant 0 : index
    %c0_0 = arith.constant 0 : index
    %0 = vector.load %arg1[%c0, %c0_0] : memref<8x128xf32, #tpu.memory_space<vmem>>, vector<8x128xf32>
    %c0_1 = arith.constant 0 : index
    %c0_2 = arith.constant 0 : index
    %1 = vector.load %arg2[%c0_1, %c0_2] : memref<8x128xf32, #tpu.memory_space<vmem>>, vector<8x128xf32>
    %c0_3 = arith.constant 0 : index
    %c0_4 = arith.constant 0 : index
    %2 = vector.load %arg3[%c0_3, %c0_4] : memref<128x384xf32, #tpu.memory_space<vmem>>, vector<128x384xf32>
    %cst = arith.constant dense<0.000000e+00> : vector<8x384xf32>
    %3 = tpu.matmul %0, %2, %cst {dimension_numbers = #tpu.dot_dimension_numbers<[1], [0], [0], [1], [0, 0, 1, 1], [], []>} : vector<8x128xf32>, vector<128x384xf32>, vector<8x384xf32> -> vector<8x384xf32>
    %c0_5 = arith.constant 0 : index
    %c0_6 = arith.constant 0 : index
    %4 = vector.load %arg4[%c0_5, %c0_6] : memref<128x384xf32, #tpu.memory_space<vmem>>, vector<128x384xf32>
    %cst_7 = arith.constant dense<0.000000e+00> : vector<8x384xf32>
    %5 = tpu.matmul %1, %4, %cst_7 {dimension_numbers = #tpu.dot_dimension_numbers<[1], [0], [0], [1], [0, 0, 1, 1], [], []>} : vector<8x128xf32>, vector<128x384xf32>, vector<8x384xf32> -> vector<8x384xf32>
    %6 = arith.addf %3, %5 : vector<8x384xf32>
    %c0_8 = arith.constant 0 : index
    %c0_9 = arith.constant 0 : index
    %7 = vector.load %arg5[%c0_8, %c0_9] : memref<1x384xf32, #tpu.memory_space<vmem>>, vector<1x384xf32>
    %8 = vector.broadcast %7 : vector<1x384xf32> to vector<8x384xf32>
    %9 = arith.addf %6, %8 : vector<8x384xf32>
    %10 = arith.negf %9 : vector<8x384xf32>
    %11 = math.exp %10 : vector<8x384xf32>
    %cst_10 = arith.constant 1.000000e+00 : f32
    %12 = vector.broadcast %cst_10 : f32 to vector<8x384xf32>
    %13 = arith.addf %12, %11 : vector<8x384xf32>
    %14 = arith.divf %12, %13 : vector<8x384xf32>
    %15 = vector.extract_strided_slice %14 {offsets = [0, 0], sizes = [8, 128], strides = [1, 1]} : vector<8x384xf32> to vector<8x128xf32>
    %16 = vector.extract_strided_slice %14 {offsets = [0, 128], sizes = [8, 128], strides = [1, 1]} : vector<8x384xf32> to vector<8x128xf32>
    %17 = vector.extract_strided_slice %14 {offsets = [0, 256], sizes = [8, 128], strides = [1, 1]} : vector<8x384xf32> to vector<8x128xf32>
    %c0_11 = arith.constant 0 : index
    %c0_12 = arith.constant 0 : index
    %18 = vector.load %arg6[%c0_11, %c0_12] : memref<128x128xf32, #tpu.memory_space<vmem>>, vector<128x128xf32>
    %cst_13 = arith.constant dense<0.000000e+00> : vector<8x128xf32>
    %19 = tpu.matmul %0, %18, %cst_13 {dimension_numbers = #tpu.dot_dimension_numbers<[1], [0], [0], [1], [0, 0, 1, 1], [], []>} : vector<8x128xf32>, vector<128x128xf32>, vector<8x128xf32> -> vector<8x128xf32>
    %20 = arith.mulf %15, %1 : vector<8x128xf32>
    %c0_14 = arith.constant 0 : index
    %c0_15 = arith.constant 0 : index
    %21 = vector.load %arg7[%c0_14, %c0_15] : memref<128x128xf32, #tpu.memory_space<vmem>>, vector<128x128xf32>
    %cst_16 = arith.constant dense<0.000000e+00> : vector<8x128xf32>
    %22 = tpu.matmul %20, %21, %cst_16 {dimension_numbers = #tpu.dot_dimension_numbers<[1], [0], [0], [1], [0, 0, 1, 1], [], []>} : vector<8x128xf32>, vector<128x128xf32>, vector<8x128xf32> -> vector<8x128xf32>
    %23 = arith.addf %19, %22 : vector<8x128xf32>
    %c0_17 = arith.constant 0 : index
    %c0_18 = arith.constant 0 : index
    %24 = vector.load %arg8[%c0_17, %c0_18] : memref<1x128xf32, #tpu.memory_space<vmem>>, vector<1x128xf32>
    %25 = vector.broadcast %24 : vector<1x128xf32> to vector<8x128xf32>
    %26 = arith.addf %23, %25 : vector<8x128xf32>
    %27 = math.tanh %26 : vector<8x128xf32>
    %28 = arith.mulf %16, %1 : vector<8x128xf32>
    %29 = arith.mulf %17, %27 : vector<8x128xf32>
    %30 = arith.addf %28, %29 : vector<8x128xf32>
    %c0_19 = arith.constant 0 : index
    %c0_20 = arith.constant 0 : index
    %31 = vector.load %arg9[%c0_19, %c0_20] : memref<8x128xf32, #tpu.memory_space<vmem>>, vector<8x128xf32>
    tpu.vector_store %arg9[%c0_19, %c0_20], %30 {strides = array<i32>} : memref<8x128xf32, #tpu.memory_space<vmem>>, vector<8x128xf32>,
    return
  }
  func.func @transform_0(%arg0: i32) -> (i32, i32) {
    %c0_i32 = arith.constant 0 : i32
    %c0_i32_0 = arith.constant 0 : i32
    return %arg0, %c0_i32 : i32, i32
  }
  func.func @transform_1(%arg0: i32) -> (i32, i32) {
    %c0_i32 = arith.constant 0 : i32
    %c0_i32_0 = arith.constant 0 : i32
    return %arg0, %c0_i32 : i32, i32
  }
  func.func @transform_2(%arg0: i32) -> (i32, i32) {
    %c0_i32 = arith.constant 0 : i32
    %c0_i32_0 = arith.constant 0 : i32
    %c0_i32_1 = arith.constant 0 : i32
    return %c0_i32, %c0_i32_0 : i32, i32
  }
  func.func @transform_3(%arg0: i32) -> (i32, i32) {
    %c0_i32 = arith.constant 0 : i32
    %c0_i32_0 = arith.constant 0 : i32
    %c0_i32_1 = arith.constant 0 : i32
    return %c0_i32, %c0_i32_0 : i32, i32
  }
  func.func @transform_4(%arg0: i32) -> (i32, i32) {
    %c0_i32 = arith.constant 0 : i32
    %c0_i32_0 = arith.constant 0 : i32
    %c0_i32_1 = arith.constant 0 : i32
    return %c0_i32, %c0_i32_0 : i32, i32
  }
  func.func @transform_5(%arg0: i32) -> (i32, i32) {
    %c0_i32 = arith.constant 0 : i32
    %c0_i32_0 = arith.constant 0 : i32
    %c0_i32_1 = arith.constant 0 : i32
    return %c0_i32, %c0_i32_0 : i32, i32
  }
  func.func @transform_6(%arg0: i32) -> (i32, i32) {
    %c0_i32 = arith.constant 0 : i32
    %c0_i32_0 = arith.constant 0 : i32
    %c0_i32_1 = arith.constant 0 : i32
    return %c0_i32, %c0_i32_0 : i32, i32
  }
  func.func @transform_7(%arg0: i32) -> (i32, i32) {
    %c0_i32 = arith.constant 0 : i32
    %c0_i32_0 = arith.constant 0 : i32
    %c0_i32_1 = arith.constant 0 : i32
    return %c0_i32, %c0_i32_0 : i32, i32
  }
  func.func @transform_8(%arg0: i32) -> (i32, i32) {
    %c0_i32 = arith.constant 0 : i32
    %c0_i32_0 = arith.constant 0 : i32
    return %arg0, %c0_i32 : i32, i32
  }
}

</mosaic_0001>

<llo_original>
// kernel: tpu_custom_call.1
$region0: #{tpu_custom_call.1}
  #allocation0 [shape = 'u32[]', space=smem, size = 0x4, offset = 0x4, fixed_abs, tag = 'smem constant byte address 0x4 - core index']
  #allocation1 [shape = 'u32[144,128]{1,0:T(1,128)}', space=vmem, size = 0x12000, scoped, tag = 'internal scratch']
  %s0 = inlined_call_operand.hbm [shape: f32[8,128], index: 0, kind: input, shape index: {}]
  %s1 = inlined_call_operand.hbm [shape: f32[8,128], index: 1, kind: input, shape index: {}]
  %s2 = inlined_call_operand.hbm [shape: f32[128,384], index: 2, kind: input, shape index: {}]
  %s3 = inlined_call_operand.hbm [shape: f32[128,384], index: 3, kind: input, shape index: {}]
  %s4 = inlined_call_operand.vmem [shape: f32[1,384], index: 4, kind: input, shape index: {}]
  %s5 = inlined_call_operand.hbm [shape: f32[128,128], index: 5, kind: input, shape index: {}]
  %s6 = inlined_call_operand.hbm [shape: f32[128,128], index: 6, kind: input, shape index: {}]
  %s7 = inlined_call_operand.vmem [shape: f32[1,128], index: 7, kind: input, shape index: {}]
  %s8 = inlined_call_operand.hbm [shape: f32[8,128], index: 8, kind: output, shape index: {}]
  %s9 = sld [smem:[#allocation0]]
  $region66: #{tpu_custom_call.1} parent=0
    _
  %s11 = ssub.s32 1, %s9
  %s12 = scalar_select 0, %s11, %s9
  $region1: #{tpu_custom_call.1} parent=0
    #allocation2 [shape = 'u8[4096]{0}', space=vmem, size = 0x1000, scoped, tag = 'input window, operand 0, single buffered']
    #allocation3 [shape = 's32[1]{0}', space=sflag, size = 0x4, scoped, tag = 'scoped memory for tpu_custom_call.1']
    #allocation4 [shape = 's32[1]{0}', space=sflag, size = 0x4, scoped, tag = 'scoped memory for tpu_custom_call.1']
    #allocation5 [shape = 'u8[4096]{0}', space=vmem, size = 0x1000, scoped, tag = 'input window, operand 1, single buffered']
    #allocation6 [shape = 's32[1]{0}', space=sflag, size = 0x4, scoped, tag = 'scoped memory for tpu_custom_call.1']
    #allocation7 [shape = 'u8[196608]{0}', space=vmem, size = 0x30000, scoped, tag = 'input window, operand 2, single buffered']
    #allocation8 [shape = 'u8[196608]{0}', space=vmem, size = 0x30000, scoped, tag = 'input window, operand 3, single buffered']
    #allocation9 [shape = 's32[1]{0}', space=sflag, size = 0x4, scoped, tag = 'scoped memory for tpu_custom_call.1']
    #allocation10 [shape = 'u8[65536]{0}', space=vmem, size = 0x10000, scoped, tag = 'input window, operand 5, single buffered']
    #allocation11 [shape = 'u8[65536]{0}', space=vmem, size = 0x10000, scoped, tag = 'input window, operand 6, single buffered']
    #allocation12 [shape = 's32[1]{0}', space=sflag, size = 0x4, scoped, tag = 'scoped memory for tpu_custom_call.1']
    #allocation13 [shape = 'u8[4096]{0}', space=vmem, size = 0x1000, scoped, tag = 'output window, operand 0, single buffered']
    %13 = vsyncpa [#allocation3], 0
    %14 = vsyncpa [#allocation6], 0
    %15 = vsyncpa [#allocation9], 0
    %16 = vsyncpa [#allocation12], 0
    %17 = vsyncpa [#allocation4], 0
    // Predicated region
    $region2: #{tpu_custom_call.1} parent=1 // pred_check
      _
    $region3: #{tpu_custom_call.1} parent=1 // pred_check_branch
      %19 = sbr.rel (0) target = $region5
    $region4: #{tpu_custom_call.1} parent=1 // pred_region
      %s21 = ssub.s32 128, 128
      %22 = vsyncadd [#allocation3], %s21
      %s24 = sshll.u32 [#allocation2], 4
      %s25 = int_to_ptr.vmem [resolvable:$true] %s24
      %27 = dma.hbm_to_vmem [thread:$0]  %s0, 128, %s25, [#allocation3]
    $region5: #{tpu_custom_call.1} parent=1 // pred_fallthru
      _
    // Predicated region
    $region6: #{tpu_custom_call.1} parent=1 // pred_check
      _
    $region7: #{tpu_custom_call.1} parent=1 // pred_check_branch
      %29 = sbr.rel (0) target = $region9
    $region8: #{tpu_custom_call.1} parent=1 // pred_region
      %s31 = ssub.s32 128, 128
      %32 = vsyncadd [#allocation6], %s31
      %s34 = sshll.u32 [#allocation5], 4
      %s35 = int_to_ptr.vmem [resolvable:$true] %s34
      %37 = dma.hbm_to_vmem [thread:$0]  %s1, 128, %s35, [#allocation6]
    $region9: #{tpu_custom_call.1} parent=1 // pred_fallthru
      _
    // Predicated region
    $region10: #{tpu_custom_call.1} parent=1 // pred_check
      _
    $region11: #{tpu_custom_call.1} parent=1 // pred_check_branch
      %39 = sbr.rel (0) target = $region13
    $region12: #{tpu_custom_call.1} parent=1 // pred_region
      %s41 = ssub.s32 6144, 6144
      %42 = vsyncadd [#allocation6], %s41
      %s43 = sshll.u32 [#allocation7], 4
      %s44 = int_to_ptr.vmem [resolvable:$true] %s43
      %49 = dma.hbm_to_vmem [thread:$0]  %s2, 6144, %s44, [#allocation6], 384, 384, 24
    $region13: #{tpu_custom_call.1} parent=1 // pred_fallthru
      _
    // Predicated region
    $region14: #{tpu_custom_call.1} parent=1 // pred_check
      _
    $region15: #{tpu_custom_call.1} parent=1 // pred_check_branch
      %51 = sbr.rel (0) target = $region17
    $region16: #{tpu_custom_call.1} parent=1 // pred_region
      %s53 = ssub.s32 6144, 6144
      %54 = vsyncadd [#allocation9], %s53
      %s55 = sshll.u32 [#allocation8], 4
      %s56 = int_to_ptr.vmem [resolvable:$true] %s55
      %61 = dma.hbm_to_vmem [thread:$0]  %s3, 6144, %s56, [#allocation9], 384, 384, 24
    $region17: #{tpu_custom_call.1} parent=1 // pred_fallthru
      _
    // Predicated region
    $region18: #{tpu_custom_call.1} parent=1 // pred_check
      _
    $region19: #{tpu_custom_call.1} parent=1 // pred_check_branch
      %63 = sbr.rel (0) target = $region21
    $region20: #{tpu_custom_call.1} parent=1 // pred_region
      _
    $region21: #{tpu_custom_call.1} parent=1 // pred_fallthru
      _
    // Predicated region
    $region22: #{tpu_custom_call.1} parent=1 // pred_check
      _
    $region23: #{tpu_custom_call.1} parent=1 // pred_check_branch
      %65 = sbr.rel (0) target = $region25
    $region24: #{tpu_custom_call.1} parent=1 // pred_region
      %s67 = ssub.s32 2048, 2048
      %68 = vsyncadd [#allocation9], %s67
      %s69 = sshll.u32 [#allocation10], 4
      %s70 = int_to_ptr.vmem [resolvable:$true] %s69
      %75 = dma.hbm_to_vmem [thread:$0]  %s5, 2048, %s70, [#allocation9], 128, 128, 8
    $region25: #{tpu_custom_call.1} parent=1 // pred_fallthru
      _
    // Predicated region
    $region26: #{tpu_custom_call.1} parent=1 // pred_check
      _
    $region27: #{tpu_custom_call.1} parent=1 // pred_check_branch
      %77 = sbr.rel (0) target = $region29
    $region28: #{tpu_custom_call.1} parent=1 // pred_region
      %s79 = ssub.s32 2048, 2048
      %80 = vsyncadd [#allocation12], %s79
      %s81 = sshll.u32 [#allocation11], 4
      %s82 = int_to_ptr.vmem [resolvable:$true] %s81
      %87 = dma.hbm_to_vmem [thread:$0]  %s6, 2048, %s82, [#allocation12], 128, 128, 8
    $region29: #{tpu_custom_call.1} parent=1 // pred_fallthru
      _
    // Predicated region
    $region30: #{tpu_custom_call.1} parent=1 // pred_check
      _
    $region31: #{tpu_custom_call.1} parent=1 // pred_check_branch
      %89 = sbr.rel (0) target = $region33
    $region32: #{tpu_custom_call.1} parent=1 // pred_region
      _
    $region33: #{tpu_custom_call.1} parent=1 // pred_fallthru
      _
    // Predicated region
    $region34: #{tpu_custom_call.1} parent=1 // pred_check
      _
    $region35: #{tpu_custom_call.1} parent=1 // pred_check_branch
      %91 = sbr.rel (0) target = $region37
    $region36: #{tpu_custom_call.1} parent=1 // pred_region
      %92 = dma.done [#allocation3], 128
    $region37: #{tpu_custom_call.1} parent=1 // pred_fallthru
      _
    // Predicated region
    $region38: #{tpu_custom_call.1} parent=1 // pred_check
      _
    $region39: #{tpu_custom_call.1} parent=1 // pred_check_branch
      %94 = sbr.rel (0) target = $region41
    $region40: #{tpu_custom_call.1} parent=1 // pred_region
      %95 = dma.done [#allocation6], 128
    $region41: #{tpu_custom_call.1} parent=1 // pred_fallthru
      _
    // Predicated region
    $region42: #{tpu_custom_call.1} parent=1 // pred_check
      _
    $region43: #{tpu_custom_call.1} parent=1 // pred_check_branch
      %97 = sbr.rel (0) target = $region45
    $region44: #{tpu_custom_call.1} parent=1 // pred_region
      %98 = dma.done [#allocation6], 6144
    $region45: #{tpu_custom_call.1} parent=1 // pred_fallthru
      _
    // Predicated region
    $region46: #{tpu_custom_call.1} parent=1 // pred_check
      _
    $region47: #{tpu_custom_call.1} parent=1 // pred_check_branch
      %100 = sbr.rel (0) target = $region49
    $region48: #{tpu_custom_call.1} parent=1 // pred_region
      %101 = dma.done [#allocation9], 6144
    $region49: #{tpu_custom_call.1} parent=1 // pred_fallthru
      _
    // Predicated region
    $region50: #{tpu_custom_call.1} parent=1 // pred_check
      _
    $region51: #{tpu_custom_call.1} parent=1 // pred_check_branch
      %103 = sbr.rel (0) target = $region53
    $region52: #{tpu_custom_call.1} parent=1 // pred_region
      %104 = dma.done [#allocation9], 2048
    $region53: #{tpu_custom_call.1} parent=1 // pred_fallthru
      _
    // Predicated region
    $region54: #{tpu_custom_call.1} parent=1 // pred_check
      _
    $region55: #{tpu_custom_call.1} parent=1 // pred_check_branch
      %106 = sbr.rel (0) target = $region57
    $region56: #{tpu_custom_call.1} parent=1 // pred_region
      %107 = dma.done [#allocation12], 2048
    $region57: #{tpu_custom_call.1} parent=1 // pred_fallthru
      _
    %v108 = vld [vmem:[#allocation2] sm:$0xff]
    %v109 = vld [vmem:[#allocation5] sm:$0xff]
    %v110 = vld [vmem:[#allocation7] sm:$0xff]
    %v111 = vld [vmem:[#allocation7 + $0x8] sm:$0xff]
    %v112 = vld [vmem:[#allocation7 + $0x10] sm:$0xff]
    %v113 = vld [vmem:[#allocation7 + $0x18] sm:$0xff]
    %v114 = vld [vmem:[#allocation7 + $0x20] sm:$0xff]
    %v115 = vld [vmem:[#allocation7 + $0x28] sm:$0xff]
    %v116 = vld [vmem:[#allocation7 + $0x30] sm:$0xff]
    %v117 = vld [vmem:[#allocation7 + $0x38] sm:$0xff]
    %v118 = vld [vmem:[#allocation7 + $0x40] sm:$0xff]
    %v119 = vld [vmem:[#allocation7 + $0x48] sm:$0xff]
    %v120 = vld [vmem:[#allocation7 + $0x50] sm:$0xff]
    %v121 = vld [vmem:[#allocation7 + $0x58] sm:$0xff]
    %v122 = vld [vmem:[#allocation7 + $0x60] sm:$0xff]
    %v123 = vld [vmem:[#allocation7 + $0x68] sm:$0xff]
    %v124 = vld [vmem:[#allocation7 + $0x70] sm:$0xff]
    %v125 = vld [vmem:[#allocation7 + $0x78] sm:$0xff]
    %v126 = vld [vmem:[#allocation7 + $0x80] sm:$0xff]
    %v127 = vld [vmem:[#allocation7 + $0x88] sm:$0xff]
    %v128 = vld [vmem:[#allocation7 + $0x90] sm:$0xff]
    %v129 = vld [vmem:[#allocation7 + $0x98] sm:$0xff]
    %v130 = vld [vmem:[#allocation7 + $0xa0] sm:$0xff]
    %v131 = vld [vmem:[#allocation7 + $0xa8] sm:$0xff]
    %v132 = vld [vmem:[#allocation7 + $0xb0] sm:$0xff]
    %v133 = vld [vmem:[#allocation7 + $0xb8] sm:$0xff]
    %v134 = vld [vmem:[#allocation7 + $0xc0] sm:$0xff]
    %v135 = vld [vmem:[#allocation7 + $0xc8] sm:$0xff]
    %v136 = vld [vmem:[#allocation7 + $0xd0] sm:$0xff]
    %v137 = vld [vmem:[#allocation7 + $0xd8] sm:$0xff]
    %v138 = vld [vmem:[#allocation7 + $0xe0] sm:$0xff]
    %v139 = vld [vmem:[#allocation7 + $0xe8] sm:$0xff]
    %v140 = vld [vmem:[#allocation7 + $0xf0] sm:$0xff]
    %v141 = vld [vmem:[#allocation7 + $0xf8] sm:$0xff]
    %v142 = vld [vmem:[#allocation7 + $0x100] sm:$0xff]
    %v143 = vld [vmem:[#allocation7 + $0x108] sm:$0xff]
    %v144 = vld [vmem:[#allocation7 + $0x110] sm:$0xff]
    %v145 = vld [vmem:[#allocation7 + $0x118] sm:$0xff]
    %v146 = vld [vmem:[#allocation7 + $0x120] sm:$0xff]
    %v147 = vld [vmem:[#allocation7 + $0x128] sm:$0xff]
    %v148 = vld [vmem:[#allocation7 + $0x130] sm:$0xff]
    %v149 = vld [vmem:[#allocation7 + $0x138] sm:$0xff]
    %v150 = vld [vmem:[#allocation7 + $0x140] sm:$0xff]
    %v151 = vld [vmem:[#allocation7 + $0x148] sm:$0xff]
    %v152 = vld [vmem:[#allocation7 + $0x150] sm:$0xff]
    %v153 = vld [vmem:[#allocation7 + $0x158] sm:$0xff]
    %v154 = vld [vmem:[#allocation7 + $0x160] sm:$0xff]
    %v155 = vld [vmem:[#allocation7 + $0x168] sm:$0xff]
    %v156 = vld [vmem:[#allocation7 + $0x170] sm:$0xff]
    %v157 = vld [vmem:[#allocation7 + $0x178] sm:$0xff]
    %v158 = vld [vmem:[#allocation8] sm:$0xff]
    %v159 = vld [vmem:[#allocation8 + $0x8] sm:$0xff]
    %v160 = vld [vmem:[#allocation8 + $0x10] sm:$0xff]
    %v161 = vld [vmem:[#allocation8 + $0x18] sm:$0xff]
    %v162 = vld [vmem:[#allocation8 + $0x20] sm:$0xff]
    %v163 = vld [vmem:[#allocation8 + $0x28] sm:$0xff]
    %v164 = vld [vmem:[#allocation8 + $0x30] sm:$0xff]
    %v165 = vld [vmem:[#allocation8 + $0x38] sm:$0xff]
    %v166 = vld [vmem:[#allocation8 + $0x40] sm:$0xff]
    %v167 = vld [vmem:[#allocation8 + $0x48] sm:$0xff]
    %v168 = vld [vmem:[#allocation8 + $0x50] sm:$0xff]
    %v169 = vld [vmem:[#allocation8 + $0x58] sm:$0xff]
    %v170 = vld [vmem:[#allocation8 + $0x60] sm:$0xff]
    %v171 = vld [vmem:[#allocation8 + $0x68] sm:$0xff]
    %v172 = vld [vmem:[#allocation8 + $0x70] sm:$0xff]
    %v173 = vld [vmem:[#allocation8 + $0x78] sm:$0xff]
    %v174 = vld [vmem:[#allocation8 + $0x80] sm:$0xff]
    %v175 = vld [vmem:[#allocation8 + $0x88] sm:$0xff]
    %v176 = vld [vmem:[#allocation8 + $0x90] sm:$0xff]
    %v177 = vld [vmem:[#allocation8 + $0x98] sm:$0xff]
    %v178 = vld [vmem:[#allocation8 + $0xa0] sm:$0xff]
    %v179 = vld [vmem:[#allocation8 + $0xa8] sm:$0xff]
    %v180 = vld [vmem:[#allocation8 + $0xb0] sm:$0xff]
    %v181 = vld [vmem:[#allocation8 + $0xb8] sm:$0xff]
    %v182 = vld [vmem:[#allocation8 + $0xc0] sm:$0xff]
    %v183 = vld [vmem:[#allocation8 + $0xc8] sm:$0xff]
    %v184 = vld [vmem:[#allocation8 + $0xd0] sm:$0xff]
    %v185 = vld [vmem:[#allocation8 + $0xd8] sm:$0xff]
    %v186 = vld [vmem:[#allocation8 + $0xe0] sm:$0xff]
    %v187 = vld [vmem:[#allocation8 + $0xe8] sm:$0xff]
    %v188 = vld [vmem:[#allocation8 + $0xf0] sm:$0xff]
    %v189 = vld [vmem:[#allocation8 + $0xf8] sm:$0xff]
    %v190 = vld [vmem:[#allocation8 + $0x100] sm:$0xff]
    %v191 = vld [vmem:[#allocation8 + $0x108] sm:$0xff]
    %v192 = vld [vmem:[#allocation8 + $0x110] sm:$0xff]
    %v193 = vld [vmem:[#allocation8 + $0x118] sm:$0xff]
    %v194 = vld [vmem:[#allocation8 + $0x120] sm:$0xff]
    %v195 = vld [vmem:[#allocation8 + $0x128] sm:$0xff]
    %v196 = vld [vmem:[#allocation8 + $0x130] sm:$0xff]
    %v197 = vld [vmem:[#allocation8 + $0x138] sm:$0xff]
    %v198 = vld [vmem:[#allocation8 + $0x140] sm:$0xff]
    %v199 = vld [vmem:[#allocation8 + $0x148] sm:$0xff]
    %v200 = vld [vmem:[#allocation8 + $0x150] sm:$0xff]
    %v201 = vld [vmem:[#allocation8 + $0x158] sm:$0xff]
    %v202 = vld [vmem:[#allocation8 + $0x160] sm:$0xff]
    %v203 = vld [vmem:[#allocation8 + $0x168] sm:$0xff]
    %v204 = vld [vmem:[#allocation8 + $0x170] sm:$0xff]
    %v205 = vld [vmem:[#allocation8 + $0x178] sm:$0xff]
    %206 = vmatprep.subr.mxu0 %v159
    %207 = vmatpush1.msra.mxu0 %v158
    %208 = vmatprep.subr.mxu0 %v162
    %209 = vmatpush1.msra.mxu0 %v161
    %210 = vmatprep.subr.mxu0 %v165
    %211 = vmatpush1.msra.mxu0 %v164
    %212 = vmatprep.subr.mxu0 %v168
    %213 = vmatpush1.msra.mxu0 %v167
    %214 = vmatprep.subr.mxu0 %v171
    %215 = vmatpush1.msra.mxu0 %v170
    %216 = vmatprep.subr.mxu0 %v174
    %217 = vmatpush1.msra.mxu0 %v173
    %218 = vmatprep.subr.mxu0 %v177
    %219 = vmatpush1.msra.mxu0 %v176
    %220 = vmatprep.subr.mxu0 %v180
    %221 = vmatpush1.msra.mxu0 %v179
    %222 = vmatprep.subr.mxu0 %v183
    %223 = vmatpush1.msra.mxu0 %v182
    %224 = vmatprep.subr.mxu0 %v186
    %225 = vmatpush1.msra.mxu0 %v185
    %226 = vmatprep.subr.mxu0 %v189
    %227 = vmatpush1.msra.mxu0 %v188
    %228 = vmatprep.subr.mxu0 %v192
    %229 = vmatpush1.msra.mxu0 %v191
    %230 = vmatprep.subr.mxu0 %v195
    %231 = vmatpush1.msra.mxu0 %v194
    %232 = vmatprep.subr.mxu0 %v198
    %233 = vmatpush1.msra.mxu0 %v197
    %234 = vmatprep.subr.mxu0 %v201
    %235 = vmatpush1.msra.mxu0 %v200
    %236 = vmatprep.subr.mxu0 %v204
    %237 = vmatpush1.msra.mxu0 %v203
    %238 = vmatprep.subr.mxu0 0.0
    %239 = vmatpush1.msra.mxu0 0.0
    %240 = vmatprep.subr.mxu0 0.0
    %241 = vmatpush1.msra.mxu0 0.0
    %242 = vmatprep.subr.mxu0 0.0
    %243 = vmatpush1.msra.mxu0 0.0
    %244 = vmatprep.subr.mxu0 0.0
    %245 = vmatpush1.msra.mxu0 0.0
    %246 = vmatprep.subr.mxu0 0.0
    %247 = vmatpush1.msra.mxu0 0.0
    %248 = vmatprep.subr.mxu0 0.0
    %249 = vmatpush1.msra.mxu0 0.0
    %250 = vmatprep.subr.mxu0 0.0
    %251 = vmatpush1.msra.mxu0 0.0
    %252 = vmatprep.subr.mxu0 0.0
    %253 = vmatpush1.msra.mxu0 0.0
    %254 = vmatprep.subr.mxu0 0.0
    %255 = vmatpush1.msra.mxu0 0.0
    %256 = vmatprep.subr.mxu0 0.0
    %257 = vmatpush1.msra.mxu0 0.0
    %258 = vmatprep.subr.mxu0 0.0
    %259 = vmatpush1.msra.mxu0 0.0
    %260 = vmatprep.subr.mxu0 0.0
    %261 = vmatpush1.msra.mxu0 0.0
    %262 = vmatprep.subr.mxu0 0.0
    %263 = vmatpush1.msra.mxu0 0.0
    %264 = vmatprep.subr.mxu0 0.0
    %265 = vmatpush1.msra.mxu0 0.0
    %266 = vmatprep.subr.mxu0 0.0
    %267 = vmatpush1.msra.mxu0 0.0
    %268 = vmatprep.subr.mxu0 0.0
    %269 = vmatpush1.msra.mxu0 0.0
    %270 = vmatprep.mubr.f32.mxu0 0.0
    %271 = vmatmul.mubr.f32.gmra.mrb[0].mxu0 %v109
    %v272 = vpop.f32.mrb[0].mxu0
    %v273 = vadd.f32 0.0, %v272
    %v274 = vpop.f32.mrb[0].mxu0
    %v275 = vadd.f32 0.0, %v274
    %276 = vdwg.mxu0
    %277 = vmatprep.subr.mxu0 0.0
    %278 = vmatpush1.msra.mxu0 %v160
    %279 = vmatprep.subr.mxu0 0.0
    %280 = vmatpush1.msra.mxu0 %v163
    %281 = vmatprep.subr.mxu0 0.0
    %282 = vmatpush1.msra.mxu0 %v166
    %283 = vmatprep.subr.mxu0 0.0
    %284 = vmatpush1.msra.mxu0 %v169
    %285 = vmatprep.subr.mxu0 0.0
    %286 = vmatpush1.msra.mxu0 %v172
    %287 = vmatprep.subr.mxu0 0.0
    %288 = vmatpush1.msra.mxu0 %v175
    %289 = vmatprep.subr.mxu0 0.0
    %290 = vmatpush1.msra.mxu0 %v178
    %291 = vmatprep.subr.mxu0 0.0
    %292 = vmatpush1.msra.mxu0 %v181
    %293 = vmatprep.subr.mxu0 0.0
    %294 = vmatpush1.msra.mxu0 %v184
    %295 = vmatprep.subr.mxu0 0.0
    %296 = vmatpush1.msra.mxu0 %v187
    %297 = vmatprep.subr.mxu0 0.0
    %298 = vmatpush1.msra.mxu0 %v190
    %299 = vmatprep.subr.mxu0 0.0
    %300 = vmatpush1.msra.mxu0 %v193
    %301 = vmatprep.subr.mxu0 0.0
    %302 = vmatpush1.msra.mxu0 %v196
    %303 = vmatprep.subr.mxu0 0.0
    %304 = vmatpush1.msra.mxu0 %v199
    %305 = vmatprep.subr.mxu0 0.0
    %306 = vmatpush1.msra.mxu0 %v202
    %307 = vmatprep.subr.mxu0 0.0
    %308 = vmatpush1.msra.mxu0 %v205
    %309 = vmatprep.subr.mxu0 0.0
    %310 = vmatpush1.msra.mxu0 0.0
    %311 = vmatprep.subr.mxu0 0.0
    %312 = vmatpush1.msra.mxu0 0.0
    %313 = vmatprep.subr.mxu0 0.0
    %314 = vmatpush1.msra.mxu0 0.0
    %315 = vmatprep.subr.mxu0 0.0
    %316 = vmatpush1.msra.mxu0 0.0
    %317 = vmatprep.subr.mxu0 0.0
    %318 = vmatpush1.msra.mxu0 0.0
    %319 = vmatprep.subr.mxu0 0.0
    %320 = vmatpush1.msra.mxu0 0.0
    %321 = vmatprep.subr.mxu0 0.0
    %322 = vmatpush1.msra.mxu0 0.0
    %323 = vmatprep.subr.mxu0 0.0
    %324 = vmatpush1.msra.mxu0 0.0
    %325 = vmatprep.subr.mxu0 0.0
    %326 = vmatpush1.msra.mxu0 0.0
    %327 = vmatprep.subr.mxu0 0.0
    %328 = vmatpush1.msra.mxu0 0.0
    %329 = vmatprep.subr.mxu0 0.0
    %330 = vmatpush1.msra.mxu0 0.0
    %331 = vmatprep.subr.mxu0 0.0
    %332 = vmatpush1.msra.mxu0 0.0
    %333 = vmatprep.subr.mxu0 0.0
    %334 = vmatpush1.msra.mxu0 0.0
    %335 = vmatprep.subr.mxu0 0.0
    %336 = vmatpush1.msra.mxu0 0.0
    %337 = vmatprep.subr.mxu0 0.0
    %338 = vmatpush1.msra.mxu0 0.0
    %339 = vmatprep.subr.mxu0 0.0
    %340 = vmatpush1.msra.mxu0 0.0
    %341 = vmatprep.mubr.f32.mxu0 0.0
    %342 = vmatmul.mubr.f32.gmra.mrb[0].mxu0 %v109
    %v343 = vpop.f32.mrb[0].mxu0
    %v344 = vadd.f32 0.0, %v343
    %v345 = vpop.f32.mrb[0].mxu0
    %346 = vdwg.mxu0
    %347 = vmatprep.subr.mxu0 %v111
    %348 = vmatpush1.msra.mxu0 %v110
    %349 = vmatprep.subr.mxu0 %v114
    %350 = vmatpush1.msra.mxu0 %v113
    %351 = vmatprep.subr.mxu0 %v117
    %352 = vmatpush1.msra.mxu0 %v116
    %353 = vmatprep.subr.mxu0 %v120
    %354 = vmatpush1.msra.mxu0 %v119
    %355 = vmatprep.subr.mxu0 %v123
    %356 = vmatpush1.msra.mxu0 %v122
    %357 = vmatprep.subr.mxu0 %v126
    %358 = vmatpush1.msra.mxu0 %v125
    %359 = vmatprep.subr.mxu0 %v129
    %360 = vmatpush1.msra.mxu0 %v128
    %361 = vmatprep.subr.mxu0 %v132
    %362 = vmatpush1.msra.mxu0 %v131
    %363 = vmatprep.subr.mxu0 %v135
    %364 = vmatpush1.msra.mxu0 %v134
    %365 = vmatprep.subr.mxu0 %v138
    %366 = vmatpush1.msra.mxu0 %v137
    %367 = vmatprep.subr.mxu0 %v141
    %368 = vmatpush1.msra.mxu0 %v140
    %369 = vmatprep.subr.mxu0 %v144
    %370 = vmatpush1.msra.mxu0 %v143
    %371 = vmatprep.subr.mxu0 %v147
    %372 = vmatpush1.msra.mxu0 %v146
    %373 = vmatprep.subr.mxu0 %v150
    %374 = vmatpush1.msra.mxu0 %v149
    %375 = vmatprep.subr.mxu0 %v153
    %376 = vmatpush1.msra.mxu0 %v152
    %377 = vmatprep.subr.mxu0 %v156
    %378 = vmatpush1.msra.mxu0 %v155
    %379 = vmatprep.subr.mxu0 0.0
    %380 = vmatpush1.msra.mxu0 0.0
    %381 = vmatprep.subr.mxu0 0.0
    %382 = vmatpush1.msra.mxu0 0.0
    %383 = vmatprep.subr.mxu0 0.0
    %384 = vmatpush1.msra.mxu0 0.0
    %385 = vmatprep.subr.mxu0 0.0
    %386 = vmatpush1.msra.mxu0 0.0
    %387 = vmatprep.subr.mxu0 0.0
    %388 = vmatpush1.msra.mxu0 0.0
    %389 = vmatprep.subr.mxu0 0.0
    %390 = vmatpush1.msra.mxu0 0.0
    %391 = vmatprep.subr.mxu0 0.0
    %392 = vmatpush1.msra.mxu0 0.0
    %393 = vmatprep.subr.mxu0 0.0
    %394 = vmatpush1.msra.mxu0 0.0
    %395 = vmatprep.subr.mxu0 0.0
    %396 = vmatpush1.msra.mxu0 0.0
    %397 = vmatprep.subr.mxu0 0.0
    %398 = vmatpush1.msra.mxu0 0.0
    %399 = vmatprep.subr.mxu0 0.0
    %400 = vmatpush1.msra.mxu0 0.0
    %401 = vmatprep.subr.mxu0 0.0
    %402 = vmatpush1.msra.mxu0 0.0
    %403 = vmatprep.subr.mxu0 0.0
    %404 = vmatpush1.msra.mxu0 0.0
    %405 = vmatprep.subr.mxu0 0.0
    %406 = vmatpush1.msra.mxu0 0.0
    %407 = vmatprep.subr.mxu0 0.0
    %408 = vmatpush1.msra.mxu0 0.0
    %409 = vmatprep.subr.mxu0 0.0
    %410 = vmatpush1.msra.mxu0 0.0
    %411 = vmatprep.mubr.f32.mxu0 0.0
    %412 = vmatmul.mubr.f32.gmra.mrb[0].mxu0 %v108
    %v413 = vpop.f32.mrb[0].mxu0
    %v414 = vadd.f32 %v273, %v413
    %v415 = vpop.f32.mrb[0].mxu0
    %v416 = vadd.f32 %v275, %v415
    %417 = vdwg.mxu0
    %418 = vmatprep.subr.mxu0 0.0
    %419 = vmatpush1.msra.mxu0 %v112
    %420 = vmatprep.subr.mxu0 0.0
    %421 = vmatpush1.msra.mxu0 %v115
    %422 = vmatprep.subr.mxu0 0.0
    %423 = vmatpush1.msra.mxu0 %v118
    %424 = vmatprep.subr.mxu0 0.0
    %425 = vmatpush1.msra.mxu0 %v121
    %426 = vmatprep.subr.mxu0 0.0
    %427 = vmatpush1.msra.mxu0 %v124
    %428 = vmatprep.subr.mxu0 0.0
    %429 = vmatpush1.msra.mxu0 %v127
    %430 = vmatprep.subr.mxu0 0.0
    %431 = vmatpush1.msra.mxu0 %v130
    %432 = vmatprep.subr.mxu0 0.0
    %433 = vmatpush1.msra.mxu0 %v133
    %434 = vmatprep.subr.mxu0 0.0
    %435 = vmatpush1.msra.mxu0 %v136
    %436 = vmatprep.subr.mxu0 0.0
    %437 = vmatpush1.msra.mxu0 %v139
    %438 = vmatprep.subr.mxu0 0.0
    %439 = vmatpush1.msra.mxu0 %v142
    %440 = vmatprep.subr.mxu0 0.0
    %441 = vmatpush1.msra.mxu0 %v145
    %442 = vmatprep.subr.mxu0 0.0
    %443 = vmatpush1.msra.mxu0 %v148
    %444 = vmatprep.subr.mxu0 0.0
    %445 = vmatpush1.msra.mxu0 %v151
    %446 = vmatprep.subr.mxu0 0.0
    %447 = vmatpush1.msra.mxu0 %v154
    %448 = vmatprep.subr.mxu0 0.0
    %449 = vmatpush1.msra.mxu0 %v157
    %450 = vmatprep.subr.mxu0 0.0
    %451 = vmatpush1.msra.mxu0 0.0
    %452 = vmatprep.subr.mxu0 0.0
    %453 = vmatpush1.msra.mxu0 0.0
    %454 = vmatprep.subr.mxu0 0.0
    %455 = vmatpush1.msra.mxu0 0.0
    %456 = vmatprep.subr.mxu0 0.0
    %457 = vmatpush1.msra.mxu0 0.0
    %458 = vmatprep.subr.mxu0 0.0
    %459 = vmatpush1.msra.mxu0 0.0
    %460 = vmatprep.subr.mxu0 0.0
    %461 = vmatpush1.msra.mxu0 0.0
    %462 = vmatprep.subr.mxu0 0.0
    %463 = vmatpush1.msra.mxu0 0.0
    %464 = vmatprep.subr.mxu0 0.0
    %465 = vmatpush1.msra.mxu0 0.0
    %466 = vmatprep.subr.mxu0 0.0
    %467 = vmatpush1.msra.mxu0 0.0
    %468 = vmatprep.subr.mxu0 0.0
    %469 = vmatpush1.msra.mxu0 0.0
    %470 = vmatprep.subr.mxu0 0.0
    %471 = vmatpush1.msra.mxu0 0.0
    %472 = vmatprep.subr.mxu0 0.0
    %473 = vmatpush1.msra.mxu0 0.0
    %474 = vmatprep.subr.mxu0 0.0
    %475 = vmatpush1.msra.mxu0 0.0
    %476 = vmatprep.subr.mxu0 0.0
    %477 = vmatpush1.msra.mxu0 0.0
    %478 = vmatprep.subr.mxu0 0.0
    %479 = vmatpush1.msra.mxu0 0.0
    %480 = vmatprep.subr.mxu0 0.0
    %481 = vmatpush1.msra.mxu0 0.0
    %482 = vmatprep.mubr.f32.mxu0 0.0
    %483 = vmatmul.mubr.f32.gmra.mrb[0].mxu0 %v108
    %v484 = vpop.f32.mrb[0].mxu0
    %v485 = vadd.f32 %v344, %v484
    %v486 = vpop.f32.mrb[0].mxu0
    %487 = vdwg.mxu0
    %v488 = vld [vmem:[%s4] sm:$0x7]
    %v490 = vlaneseq
    %v491 = vshrl.u32 %v490, 7
    %v492 = vsub.s32 0, %v491
    %v493 = vrot.slane %v488, %v492
    %v494 = vlaneseq
    %v495 = vshrl.u32 %v494, 7
    %v496 = vsub.s32 1, %v495
    %v497 = vrot.slane %v488, %v496
    %v498 = vlaneseq
    %v499 = vshrl.u32 %v498, 7
    %v500 = vsub.s32 2, %v499
    %v501 = vrot.slane %v488, %v500
    %v505 = vadd.f32 %v414, %v493
    %v506 = vadd.f32 %v416, %v497
    %v507 = vadd.f32 %v485, %v501
    %v508 = vxor.u32 %v505, 2147483648
    %v509 = vxor.u32 %v506, 2147483648
    %v510 = vxor.u32 %v507, 2147483648
    %v511 = vmul.f32 %v508, 1.442695
    %v512 = vpow.pop %v511
    %v513 = vmul.f32 %v509, 1.442695
    %v514 = vpow.pop %v513
    %v515 = vmul.f32 %v510, 1.442695
    %v516 = vpow.pop %v515
    %v517 = vadd.f32 %v512, 1.0
    %v518 = vadd.f32 %v514, 1.0
    %v519 = vadd.f32 %v516, 1.0
    %v520 = vrcp.pop %v517
    %v521 = vmul.f32 1.0, %v520
    %v522 = vrcp.pop %v518
    %v523 = vmul.f32 1.0, %v522
    %v524 = vrcp.pop %v519
    %v525 = vmul.f32 1.0, %v524
    %v526 = vld [vmem:[#allocation10] sm:$0xff]
    %v527 = vld [vmem:[#allocation10 + $0x8] sm:$0xff]
    %v528 = vld [vmem:[#allocation10 + $0x10] sm:$0xff]
    %v529 = vld [vmem:[#allocation10 + $0x18] sm:$0xff]
    %v530 = vld [vmem:[#allocation10 + $0x20] sm:$0xff]
    %v531 = vld [vmem:[#allocation10 + $0x28] sm:$0xff]
    %v532 = vld [vmem:[#allocation10 + $0x30] sm:$0xff]
    %v533 = vld [vmem:[#allocation10 + $0x38] sm:$0xff]
    %v534 = vld [vmem:[#allocation10 + $0x40] sm:$0xff]
    %v535 = vld [vmem:[#allocation10 + $0x48] sm:$0xff]
    %v536 = vld [vmem:[#allocation10 + $0x50] sm:$0xff]
    %v537 = vld [vmem:[#allocation10 + $0x58] sm:$0xff]
    %v538 = vld [vmem:[#allocation10 + $0x60] sm:$0xff]
    %v539 = vld [vmem:[#allocation10 + $0x68] sm:$0xff]
    %v540 = vld [vmem:[#allocation10 + $0x70] sm:$0xff]
    %v541 = vld [vmem:[#allocation10 + $0x78] sm:$0xff]
    %v542 = vmul.f32 %v521, %v109
    %v543 = vld [vmem:[#allocation11] sm:$0xff]
    %v544 = vld [vmem:[#allocation11 + $0x8] sm:$0xff]
    %v545 = vld [vmem:[#allocation11 + $0x10] sm:$0xff]
    %v546 = vld [vmem:[#allocation11 + $0x18] sm:$0xff]
    %v547 = vld [vmem:[#allocation11 + $0x20] sm:$0xff]
    %v548 = vld [vmem:[#allocation11 + $0x28] sm:$0xff]
    %v549 = vld [vmem:[#allocation11 + $0x30] sm:$0xff]
    %v550 = vld [vmem:[#allocation11 + $0x38] sm:$0xff]
    %v551 = vld [vmem:[#allocation11 + $0x40] sm:$0xff]
    %v552 = vld [vmem:[#allocation11 + $0x48] sm:$0xff]
    %v553 = vld [vmem:[#allocation11 + $0x50] sm:$0xff]
    %v554 = vld [vmem:[#allocation11 + $0x58] sm:$0xff]
    %v555 = vld [vmem:[#allocation11 + $0x60] sm:$0xff]
    %v556 = vld [vmem:[#allocation11 + $0x68] sm:$0xff]
    %v557 = vld [vmem:[#allocation11 + $0x70] sm:$0xff]
    %v558 = vld [vmem:[#allocation11 + $0x78] sm:$0xff]
    %559 = vmatprep.subr.mxu0 0.0
    %560 = vmatpush1.msra.mxu0 %v543
    %561 = vmatprep.subr.mxu0 0.0
    %562 = vmatpush1.msra.mxu0 %v544
    %563 = vmatprep.subr.mxu0 0.0
    %564 = vmatpush1.msra.mxu0 %v545
    %565 = vmatprep.subr.mxu0 0.0
    %566 = vmatpush1.msra.mxu0 %v546
    %567 = vmatprep.subr.mxu0 0.0
    %568 = vmatpush1.msra.mxu0 %v547
    %569 = vmatprep.subr.mxu0 0.0
    %570 = vmatpush1.msra.mxu0 %v548
    %571 = vmatprep.subr.mxu0 0.0
    %572 = vmatpush1.msra.mxu0 %v549
    %573 = vmatprep.subr.mxu0 0.0
    %574 = vmatpush1.msra.mxu0 %v550
    %575 = vmatprep.subr.mxu0 0.0
    %576 = vmatpush1.msra.mxu0 %v551
    %577 = vmatprep.subr.mxu0 0.0
    %578 = vmatpush1.msra.mxu0 %v552
    %579 = vmatprep.subr.mxu0 0.0
    %580 = vmatpush1.msra.mxu0 %v553
    %581 = vmatprep.subr.mxu0 0.0
    %582 = vmatpush1.msra.mxu0 %v554
    %583 = vmatprep.subr.mxu0 0.0
    %584 = vmatpush1.msra.mxu0 %v555
    %585 = vmatprep.subr.mxu0 0.0
    %586 = vmatpush1.msra.mxu0 %v556
    %587 = vmatprep.subr.mxu0 0.0
    %588 = vmatpush1.msra.mxu0 %v557
    %589 = vmatprep.subr.mxu0 0.0
    %590 = vmatpush1.msra.mxu0 %v558
    %591 = vmatprep.subr.mxu0 0.0
    %592 = vmatpush1.msra.mxu0 0.0
    %593 = vmatprep.subr.mxu0 0.0
    %594 = vmatpush1.msra.mxu0 0.0
    %595 = vmatprep.subr.mxu0 0.0
    %596 = vmatpush1.msra.mxu0 0.0
    %597 = vmatprep.subr.mxu0 0.0
    %598 = vmatpush1.msra.mxu0 0.0
    %599 = vmatprep.subr.mxu0 0.0
    %600 = vmatpush1.msra.mxu0 0.0
    %601 = vmatprep.subr.mxu0 0.0
    %602 = vmatpush1.msra.mxu0 0.0
    %603 = vmatprep.subr.mxu0 0.0
    %604 = vmatpush1.msra.mxu0 0.0
    %605 = vmatprep.subr.mxu0 0.0
    %606 = vmatpush1.msra.mxu0 0.0
    %607 = vmatprep.subr.mxu0 0.0
    %608 = vmatpush1.msra.mxu0 0.0
    %609 = vmatprep.subr.mxu0 0.0
    %610 = vmatpush1.msra.mxu0 0.0
    %611 = vmatprep.subr.mxu0 0.0
    %612 = vmatpush1.msra.mxu0 0.0
    %613 = vmatprep.subr.mxu0 0.0
    %614 = vmatpush1.msra.mxu0 0.0
    %615 = vmatprep.subr.mxu0 0.0
    %616 = vmatpush1.msra.mxu0 0.0
    %617 = vmatprep.subr.mxu0 0.0
    %618 = vmatpush1.msra.mxu0 0.0
    %619 = vmatprep.subr.mxu0 0.0
    %620 = vmatpush1.msra.mxu0 0.0
    %621 = vmatprep.subr.mxu0 0.0
    %622 = vmatpush1.msra.mxu0 0.0
    %623 = vmatprep.mubr.f32.mxu0 0.0
    %624 = vmatmul.mubr.f32.gmra.mrb[0].mxu0 %v542
    %v625 = vpop.f32.mrb[0].mxu0
    %v626 = vadd.f32 0.0, %v625
    %v627 = vpop.f32.mrb[0].mxu0
    %628 = vdwg.mxu0
    %629 = vmatprep.subr.mxu0 0.0
    %630 = vmatpush1.msra.mxu0 %v526
    %631 = vmatprep.subr.mxu0 0.0
    %632 = vmatpush1.msra.mxu0 %v527
    %633 = vmatprep.subr.mxu0 0.0
    %634 = vmatpush1.msra.mxu0 %v528
    %635 = vmatprep.subr.mxu0 0.0
    %636 = vmatpush1.msra.mxu0 %v529
    %637 = vmatprep.subr.mxu0 0.0
    %638 = vmatpush1.msra.mxu0 %v530
    %639 = vmatprep.subr.mxu0 0.0
    %640 = vmatpush1.msra.mxu0 %v531
    %641 = vmatprep.subr.mxu0 0.0
    %642 = vmatpush1.msra.mxu0 %v532
    %643 = vmatprep.subr.mxu0 0.0
    %644 = vmatpush1.msra.mxu0 %v533
    %645 = vmatprep.subr.mxu0 0.0
    %646 = vmatpush1.msra.mxu0 %v534
    %647 = vmatprep.subr.mxu0 0.0
    %648 = vmatpush1.msra.mxu0 %v535
    %649 = vmatprep.subr.mxu0 0.0
    %650 = vmatpush1.msra.mxu0 %v536
    %651 = vmatprep.subr.mxu0 0.0
    %652 = vmatpush1.msra.mxu0 %v537
    %653 = vmatprep.subr.mxu0 0.0
    %654 = vmatpush1.msra.mxu0 %v538
    %655 = vmatprep.subr.mxu0 0.0
    %656 = vmatpush1.msra.mxu0 %v539
    %657 = vmatprep.subr.mxu0 0.0
    %658 = vmatpush1.msra.mxu0 %v540
    %659 = vmatprep.subr.mxu0 0.0
    %660 = vmatpush1.msra.mxu0 %v541
    %661 = vmatprep.subr.mxu0 0.0
    %662 = vmatpush1.msra.mxu0 0.0
    %663 = vmatprep.subr.mxu0 0.0
    %664 = vmatpush1.msra.mxu0 0.0
    %665 = vmatprep.subr.mxu0 0.0
    %666 = vmatpush1.msra.mxu0 0.0
    %667 = vmatprep.subr.mxu0 0.0
    %668 = vmatpush1.msra.mxu0 0.0
    %669 = vmatprep.subr.mxu0 0.0
    %670 = vmatpush1.msra.mxu0 0.0
    %671 = vmatprep.subr.mxu0 0.0
    %672 = vmatpush1.msra.mxu0 0.0
    %673 = vmatprep.subr.mxu0 0.0
    %674 = vmatpush1.msra.mxu0 0.0
    %675 = vmatprep.subr.mxu0 0.0
    %676 = vmatpush1.msra.mxu0 0.0
    %677 = vmatprep.subr.mxu0 0.0
    %678 = vmatpush1.msra.mxu0 0.0
    %679 = vmatprep.subr.mxu0 0.0
    %680 = vmatpush1.msra.mxu0 0.0
    %681 = vmatprep.subr.mxu0 0.0
    %682 = vmatpush1.msra.mxu0 0.0
    %683 = vmatprep.subr.mxu0 0.0
    %684 = vmatpush1.msra.mxu0 0.0
    %685 = vmatprep.subr.mxu0 0.0
    %686 = vmatpush1.msra.mxu0 0.0
    %687 = vmatprep.subr.mxu0 0.0
    %688 = vmatpush1.msra.mxu0 0.0
    %689 = vmatprep.subr.mxu0 0.0
    %690 = vmatpush1.msra.mxu0 0.0
    %691 = vmatprep.subr.mxu0 0.0
    %692 = vmatpush1.msra.mxu0 0.0
    %693 = vmatprep.mubr.f32.mxu0 0.0
    %694 = vmatmul.mubr.f32.gmra.mrb[0].mxu0 %v108
    %v695 = vpop.f32.mrb[0].mxu0
    %v696 = vadd.f32 %v626, %v695
    %v697 = vpop.f32.mrb[0].mxu0
    %698 = vdwg.mxu0
    %v699 = vld [vmem:[%s7] sm:$0x1]
    %v701 = vlaneseq
    %v702 = vshrl.u32 %v701, 7
    %v703 = vsub.s32 0, %v702
    %v704 = vrot.slane %v699, %v703
    %v706 = vadd.f32 %v696, %v704
    %v707 = vtanh.pop %v706
    %v708 = vmul.f32 %v523, %v109
    %v709 = vmul.f32 %v525, %v707
    %v710 = vadd.f32 %v708, %v709
    %711 = vst [vmem:[#allocation13] sm:$0xff] %v710
    // Predicated region
    $region58: #{tpu_custom_call.1} parent=1 // pred_check
      _
    $region59: #{tpu_custom_call.1} parent=1 // pred_check_branch
      %713 = sbr.rel (0) target = $region61
    $region60: #{tpu_custom_call.1} parent=1 // pred_region
      %s715 = ssub.s32 128, 128
      %716 = vsyncadd [#allocation4], %s715
      %s718 = sshll.u32 [#allocation13], 4
      %s719 = int_to_ptr.vmem [resolvable:$true] %s718
      %721 = dma.vmem_to_hbm [thread:$0]  %s719, 128, %s8, [#allocation4]
    $region61: #{tpu_custom_call.1} parent=1 // pred_fallthru
      _
    // Predicated region
    $region62: #{tpu_custom_call.1} parent=1 // pred_check
      _
    $region63: #{tpu_custom_call.1} parent=1 // pred_check_branch
      %723 = sbr.rel (0) target = $region65
    $region64: #{tpu_custom_call.1} parent=1 // pred_region
      %724 = dma.done [#allocation4], 128
    $region65: #{tpu_custom_call.1} parent=1 // pred_fallthru
      _
    %725 = vsyncpa [#allocation3], 1
    %726 = vsyncpa [#allocation6], 1
    %727 = vsyncpa [#allocation9], 1
    %728 = vsyncpa [#allocation12], 1
    %729 = vsyncpa [#allocation4], 1

// kernel: tpu_custom_call.1
$region0: #{tpu_custom_call.1}
  #allocation0 [shape = 'u32[]', space=smem, size = 0x4, offset = 0x4, fixed_abs, tag = 'smem constant byte address 0x4 - core index']
  #allocation1 [shape = 'u32[144,128]{1,0:T(1,128)}', space=vmem, size = 0x12000, scoped, tag = 'internal scratch']
  %s0 = inlined_call_operand.hbm [shape: f32[8,128], index: 0, kind: input, shape index: {}]
  %s1 = inlined_call_operand.hbm [shape: f32[8,128], index: 1, kind: input, shape index: {}]
  %s2 = inlined_call_operand.hbm [shape: f32[128,384], index: 2, kind: input, shape index: {}]
  %s3 = inlined_call_operand.hbm [shape: f32[128,384], index: 3, kind: input, shape index: {}]
  %s4 = inlined_call_operand.vmem [shape: f32[1,384], index: 4, kind: input, shape index: {}]
  %s5 = inlined_call_operand.hbm [shape: f32[128,128], index: 5, kind: input, shape index: {}]
  %s6 = inlined_call_operand.hbm [shape: f32[128,128], index: 6, kind: input, shape index: {}]
  %s7 = inlined_call_operand.vmem [shape: f32[1,128], index: 7, kind: input, shape index: {}]
  %s8 = inlined_call_operand.hbm [shape: f32[8,128], index: 8, kind: output, shape index: {}]
  %s9 = sld [smem:[#allocation0]]
  $region66: #{tpu_custom_call.1} parent=0
    _
  %s11 = ssub.s32 1, %s9
  %s12 = scalar_select 0, %s11, %s9
  $region1: #{tpu_custom_call.1} parent=0
    #allocation2 [shape = 'u8[4096]{0}', space=vmem, size = 0x1000, scoped, tag = 'input window, operand 0, single buffered']
    #allocation3 [shape = 's32[1]{0}', space=sflag, size = 0x4, scoped, tag = 'scoped memory for tpu_custom_call.1']
    #allocation4 [shape = 's32[1]{0}', space=sflag, size = 0x4, scoped, tag = 'scoped memory for tpu_custom_call.1']
    #allocation5 [shape = 'u8[4096]{0}', space=vmem, size = 0x1000, scoped, tag = 'input window, operand 1, single buffered']
    #allocation6 [shape = 's32[1]{0}', space=sflag, size = 0x4, scoped, tag = 'scoped memory for tpu_custom_call.1']
    #allocation7 [shape = 'u8[196608]{0}', space=vmem, size = 0x30000, scoped, tag = 'input window, operand 2, single buffered']
    #allocation8 [shape = 'u8[196608]{0}', space=vmem, size = 0x30000, scoped, tag = 'input window, operand 3, single buffered']
    #allocation9 [shape = 's32[1]{0}', space=sflag, size = 0x4, scoped, tag = 'scoped memory for tpu_custom_call.1']
    #allocation10 [shape = 'u8[65536]{0}', space=vmem, size = 0x10000, scoped, tag = 'input window, operand 5, single buffered']
    #allocation11 [shape = 'u8[65536]{0}', space=vmem, size = 0x10000, scoped, tag = 'input window, operand 6, single buffered']
    #allocation12 [shape = 's32[1]{0}', space=sflag, size = 0x4, scoped, tag = 'scoped memory for tpu_custom_call.1']
    #allocation13 [shape = 'u8[4096]{0}', space=vmem, size = 0x1000, scoped, tag = 'output window, operand 0, single buffered']
    %13 = vsyncpa [#allocation3], 0
    %14 = vsyncpa [#allocation6], 0
    %15 = vsyncpa [#allocation9], 0
    %16 = vsyncpa [#allocation12], 0
    %17 = vsyncpa [#allocation4], 0
    // Predicated region
    $region2: #{tpu_custom_call.1} parent=1 // pred_check
      _
    $region3: #{tpu_custom_call.1} parent=1 // pred_check_branch
      %19 = sbr.rel (0) target = $region5
    $region4: #{tpu_custom_call.1} parent=1 // pred_region
      %s21 = ssub.s32 128, 128
      %22 = vsyncadd [#allocation3], %s21
      %s24 = sshll.u32 [#allocation2], 4
      %s25 = int_to_ptr.vmem [resolvable:$true] %s24
      %27 = dma.hbm_to_vmem [thread:$0]  %s0, 128, %s25, [#allocation3]
    $region5: #{tpu_custom_call.1} parent=1 // pred_fallthru
      _
    // Predicated region
    $region6: #{tpu_custom_call.1} parent=1 // pred_check
      _
    $region7: #{tpu_custom_call.1} parent=1 // pred_check_branch
      %29 = sbr.rel (0) target = $region9
    $region8: #{tpu_custom_call.1} parent=1 // pred_region
      %s31 = ssub.s32 128, 128
      %32 = vsyncadd [#allocation6], %s31
      %s34 = sshll.u32 [#allocation5], 4
      %s35 = int_to_ptr.vmem [resolvable:$true] %s34
      %37 = dma.hbm_to_vmem [thread:$0]  %s1, 128, %s35, [#allocation6]
    $region9: #{tpu_custom_call.1} parent=1 // pred_fallthru
      _
    // Predicated region
    $region10: #{tpu_custom_call.1} parent=1 // pred_check
      _
    $region11: #{tpu_custom_call.1} parent=1 // pred_check_branch
      %39 = sbr.rel (0) target = $region13
    $region12: #{tpu_custom_call.1} parent=1 // pred_region
      %s41 = ssub.s32 6144, 6144
      %42 = vsyncadd [#allocation6], %s41
      %s43 = sshll.u32 [#allocation7], 4
      %s44 = int_to_ptr.vmem [resolvable:$true] %s43
      %49 = dma.hbm_to_vmem [thread:$0]  %s2, 6144, %s44, [#allocation6], 384, 384, 24
    $region13: #{tpu_custom_call.1} parent=1 // pred_fallthru
      _
    // Predicated region
    $region14: #{tpu_custom_call.1} parent=1 // pred_check
      _
    $region15: #{tpu_custom_call.1} parent=1 // pred_check_branch
      %51 = sbr.rel (0) target = $region17
    $region16: #{tpu_custom_call.1} parent=1 // pred_region
      %s53 = ssub.s32 6144, 6144
      %54 = vsyncadd [#allocation9], %s53
      %s55 = sshll.u32 [#allocation8], 4
      %s56 = int_to_ptr.vmem [resolvable:$true] %s55
      %61 = dma.hbm_to_vmem [thread:$0]  %s3, 6144, %s56, [#allocation9], 384, 384, 24
    $region17: #{tpu_custom_call.1} parent=1 // pred_fallthru
      _
    // Predicated region
    $region18: #{tpu_custom_call.1} parent=1 // pred_check
      _
    $region19: #{tpu_custom_call.1} parent=1 // pred_check_branch
      %63 = sbr.rel (0) target = $region21
    $region20: #{tpu_custom_call.1} parent=1 // pred_region
      _
    $region21: #{tpu_custom_call.1} parent=1 // pred_fallthru
      _
    // Predicated region
    $region22: #{tpu_custom_call.1} parent=1 // pred_check
      _
    $region23: #{tpu_custom_call.1} parent=1 // pred_check_branch
      %65 = sbr.rel (0) target = $region25
    $region24: #{tpu_custom_call.1} parent=1 // pred_region
      %s67 = ssub.s32 2048, 2048
      %68 = vsyncadd [#allocation9], %s67
      %s69 = sshll.u32 [#allocation10], 4
      %s70 = int_to_ptr.vmem [resolvable:$true] %s69
      %75 = dma.hbm_to_vmem [thread:$0]  %s5, 2048, %s70, [#allocation9], 128, 128, 8
    $region25: #{tpu_custom_call.1} parent=1 // pred_fallthru
      _
    // Predicated region
    $region26: #{tpu_custom_call.1} parent=1 // pred_check
      _
    $region27: #{tpu_custom_call.1} parent=1 // pred_check_branch
      %77 = sbr.rel (0) target = $region29
    $region28: #{tpu_custom_call.1} parent=1 // pred_region
      %s79 = ssub.s32 2048, 2048
      %80 = vsyncadd [#allocation12], %s79
      %s81 = sshll.u32 [#allocation11], 4
      %s82 = int_to_ptr.vmem [resolvable:$true] %s81
      %87 = dma.hbm_to_vmem [thread:$0]  %s6, 2048, %s82, [#allocation12], 128, 128, 8
    $region29: #{tpu_custom_call.1} parent=1 // pred_fallthru
      _
    // Predicated region
    $region30: #{tpu_custom_call.1} parent=1 // pred_check
      _
    $region31: #{tpu_custom_call.1} parent=1 // pred_check_branch
      %89 = sbr.rel (0) target = $region33
    $region32: #{tpu_custom_call.1} parent=1 // pred_region
      _
    $region33: #{tpu_custom_call.1} parent=1 // pred_fallthru
      _
    // Predicated region
    $region34: #{tpu_custom_call.1} parent=1 // pred_check
      _
    $region35: #{tpu_custom_call.1} parent=1 // pred_check_branch
      %91 = sbr.rel (0) target = $region37
    $region36: #{tpu_custom_call.1} parent=1 // pred_region
      %92 = dma.done [#allocation3], 128
    $region37: #{tpu_custom_call.1} parent=1 // pred_fallthru
      _
    // Predicated region
    $region38: #{tpu_custom_call.1} parent=1 // pred_check
      _
    $region39: #{tpu_custom_call.1} parent=1 // pred_check_branch
      %94 = sbr.rel (0) target = $region41
    $region40: #{tpu_custom_call.1} parent=1 // pred_region
      %95 = dma.done [#allocation6], 128
    $region41: #{tpu_custom_call.1} parent=1 // pred_fallthru
      _
    // Predicated region
    $region42: #{tpu_custom_call.1} parent=1 // pred_check
      _
    $region43: #{tpu_custom_call.1} parent=1 // pred_check_branch
      %97 = sbr.rel (0) target = $region45
    $region44: #{tpu_custom_call.1} parent=1 // pred_region
      %98 = dma.done [#allocation6], 6144
    $region45: #{tpu_custom_call.1} parent=1 // pred_fallthru
      _
    // Predicated region
    $region46: #{tpu_custom_call.1} parent=1 // pred_check
      _
    $region47: #{tpu_custom_call.1} parent=1 // pred_check_branch
      %100 = sbr.rel (0) target = $region49
    $region48: #{tpu_custom_call.1} parent=1 // pred_region
      %101 = dma.done [#allocation9], 6144
    $region49: #{tpu_custom_call.1} parent=1 // pred_fallthru
      _
    // Predicated region
    $region50: #{tpu_custom_call.1} parent=1 // pred_check
      _
    $region51: #{tpu_custom_call.1} parent=1 // pred_check_branch
      %103 = sbr.rel (0) target = $region53
    $region52: #{tpu_custom_call.1} parent=1 // pred_region
      %104 = dma.done [#allocation9], 2048
    $region53: #{tpu_custom_call.1} parent=1 // pred_fallthru
      _
    // Predicated region
    $region54: #{tpu_custom_call.1} parent=1 // pred_check
      _
    $region55: #{tpu_custom_call.1} parent=1 // pred_check_branch
      %106 = sbr.rel (0) target = $region57
    $region56: #{tpu_custom_call.1} parent=1 // pred_region
      %107 = dma.done [#allocation12], 2048
    $region57: #{tpu_custom_call.1} parent=1 // pred_fallthru
      _
    %v108 = vld [vmem:[#allocation2] sm:$0xff]
    %v109 = vld [vmem:[#allocation5] sm:$0xff]
    %v110 = vld [vmem:[#allocation7] sm:$0xff]
    %v111 = vld [vmem:[#allocation7 + $0x8] sm:$0xff]
    %v112 = vld [vmem:[#allocation7 + $0x10] sm:$0xff]
    %v113 = vld [vmem:[#allocation7 + $0x18] sm:$0xff]
    %v114 = vld [vmem:[#allocation7 + $0x20] sm:$0xff]
    %v115 = vld [vmem:[#allocation7 + $0x28] sm:$0xff]
    %v116 = vld [vmem:[#allocation7 + $0x30] sm:$0xff]
    %v117 = vld [vmem:[#allocation7 + $0x38] sm:$0xff]
    %v118 = vld [vmem:[#allocation7 + $0x40] sm:$0xff]
    %v119 = vld [vmem:[#allocation7 + $0x48] sm:$0xff]
    %v120 = vld [vmem:[#allocation7 + $0x50] sm:$0xff]
    %v121 = vld [vmem:[#allocation7 + $0x58] sm:$0xff]
    %v122 = vld [vmem:[#allocation7 + $0x60] sm:$0xff]
    %v123 = vld [vmem:[#allocation7 + $0x68] sm:$0xff]
    %v124 = vld [vmem:[#allocation7 + $0x70] sm:$0xff]
    %v125 = vld [vmem:[#allocation7 + $0x78] sm:$0xff]
    %v126 = vld [vmem:[#allocation7 + $0x80] sm:$0xff]
    %v127 = vld [vmem:[#allocation7 + $0x88] sm:$0xff]
    %v128 = vld [vmem:[#allocation7 + $0x90] sm:$0xff]
    %v129 = vld [vmem:[#allocation7 + $0x98] sm:$0xff]
    %v130 = vld [vmem:[#allocation7 + $0xa0] sm:$0xff]
    %v131 = vld [vmem:[#allocation7 + $0xa8] sm:$0xff]
    %v132 = vld [vmem:[#allocation7 + $0xb0] sm:$0xff]
    %v133 = vld [vmem:[#allocation7 + $0xb8] sm:$0xff]
    %v134 = vld [vmem:[#allocation7 + $0xc0] sm:$0xff]
    %v135 = vld [vmem:[#allocation7 + $0xc8] sm:$0xff]
    %v136 = vld [vmem:[#allocation7 + $0xd0] sm:$0xff]
    %v137 = vld [vmem:[#allocation7 + $0xd8] sm:$0xff]
    %v138 = vld [vmem:[#allocation7 + $0xe0] sm:$0xff]
    %v139 = vld [vmem:[#allocation7 + $0xe8] sm:$0xff]
    %v140 = vld [vmem:[#allocation7 + $0xf0] sm:$0xff]
    %v141 = vld [vmem:[#allocation7 + $0xf8] sm:$0xff]
    %v142 = vld [vmem:[#allocation7 + $0x100] sm:$0xff]
    %v143 = vld [vmem:[#allocation7 + $0x108] sm:$0xff]
    %v144 = vld [vmem:[#allocation7 + $0x110] sm:$0xff]
    %v145 = vld [vmem:[#allocation7 + $0x118] sm:$0xff]
    %v146 = vld [vmem:[#allocation7 + $0x120] sm:$0xff]
    %v147 = vld [vmem:[#allocation7 + $0x128] sm:$0xff]
    %v148 = vld [vmem:[#allocation7 + $0x130] sm:$0xff]
    %v149 = vld [vmem:[#allocation7 + $0x138] sm:$0xff]
    %v150 = vld [vmem:[#allocation7 + $0x140] sm:$0xff]
    %v151 = vld [vmem:[#allocation7 + $0x148] sm:$0xff]
    %v152 = vld [vmem:[#allocation7 + $0x150] sm:$0xff]
    %v153 = vld [vmem:[#allocation7 + $0x158] sm:$0xff]
    %v154 = vld [vmem:[#allocation7 + $0x160] sm:$0xff]
    %v155 = vld [vmem:[#allocation7 + $0x168] sm:$0xff]
    %v156 = vld [vmem:[#allocation7 + $0x170] sm:$0xff]
    %v157 = vld [vmem:[#allocation7 + $0x178] sm:$0xff]
    %v158 = vld [vmem:[#allocation8] sm:$0xff]
    %v159 = vld [vmem:[#allocation8 + $0x8] sm:$0xff]
    %v160 = vld [vmem:[#allocation8 + $0x10] sm:$0xff]
    %v161 = vld [vmem:[#allocation8 + $0x18] sm:$0xff]
    %v162 = vld [vmem:[#allocation8 + $0x20] sm:$0xff]
    %v163 = vld [vmem:[#allocation8 + $0x28] sm:$0xff]
    %v164 = vld [vmem:[#allocation8 + $0x30] sm:$0xff]
    %v165 = vld [vmem:[#allocation8 + $0x38] sm:$0xff]
    %v166 = vld [vmem:[#allocation8 + $0x40] sm:$0xff]
    %v167 = vld [vmem:[#allocation8 + $0x48] sm:$0xff]
    %v168 = vld [vmem:[#allocation8 + $0x50] sm:$0xff]
    %v169 = vld [vmem:[#allocation8 + $0x58] sm:$0xff]
    %v170 = vld [vmem:[#allocation8 + $0x60] sm:$0xff]
    %v171 = vld [vmem:[#allocation8 + $0x68] sm:$0xff]
    %v172 = vld [vmem:[#allocation8 + $0x70] sm:$0xff]
    %v173 = vld [vmem:[#allocation8 + $0x78] sm:$0xff]
    %v174 = vld [vmem:[#allocation8 + $0x80] sm:$0xff]
    %v175 = vld [vmem:[#allocation8 + $0x88] sm:$0xff]
    %v176 = vld [vmem:[#allocation8 + $0x90] sm:$0xff]
    %v177 = vld [vmem:[#allocation8 + $0x98] sm:$0xff]
    %v178 = vld [vmem:[#allocation8 + $0xa0] sm:$0xff]
    %v179 = vld [vmem:[#allocation8 + $0xa8] sm:$0xff]
    %v180 = vld [vmem:[#allocation8 + $0xb0] sm:$0xff]
    %v181 = vld [vmem:[#allocation8 + $0xb8] sm:$0xff]
    %v182 = vld [vmem:[#allocation8 + $0xc0] sm:$0xff]
    %v183 = vld [vmem:[#allocation8 + $0xc8] sm:$0xff]
    %v184 = vld [vmem:[#allocation8 + $0xd0] sm:$0xff]
    %v185 = vld [vmem:[#allocation8 + $0xd8] sm:$0xff]
    %v186 = vld [vmem:[#allocation8 + $0xe0] sm:$0xff]
    %v187 = vld [vmem:[#allocation8 + $0xe8] sm:$0xff]
    %v188 = vld [vmem:[#allocation8 + $0xf0] sm:$0xff]
    %v189 = vld [vmem:[#allocation8 + $0xf8] sm:$0xff]
    %v190 = vld [vmem:[#allocation8 + $0x100] sm:$0xff]
    %v191 = vld [vmem:[#allocation8 + $0x108] sm:$0xff]
    %v192 = vld [vmem:[#allocation8 + $0x110] sm:$0xff]
    %v193 = vld [vmem:[#allocation8 + $0x118] sm:$0xff]
    %v194 = vld [vmem:[#allocation8 + $0x120] sm:$0xff]
    %v195 = vld [vmem:[#allocation8 + $0x128] sm:$0xff]
    %v196 = vld [vmem:[#allocation8 + $0x130] sm:$0xff]
    %v197 = vld [vmem:[#allocation8 + $0x138] sm:$0xff]
    %v198 = vld [vmem:[#allocation8 + $0x140] sm:$0xff]
    %v199 = vld [vmem:[#allocation8 + $0x148] sm:$0xff]
    %v200 = vld [vmem:[#allocation8 + $0x150] sm:$0xff]
    %v201 = vld [vmem:[#allocation8 + $0x158] sm:$0xff]
    %v202 = vld [vmem:[#allocation8 + $0x160] sm:$0xff]
    %v203 = vld [vmem:[#allocation8 + $0x168] sm:$0xff]
    %v204 = vld [vmem:[#allocation8 + $0x170] sm:$0xff]
    %v205 = vld [vmem:[#allocation8 + $0x178] sm:$0xff]
    %206 = vmatprep.subr.mxu0 %v159
    %207 = vmatpush1.msra.mxu0 %v158
    %208 = vmatprep.subr.mxu0 %v162
    %209 = vmatpush1.msra.mxu0 %v161
    %210 = vmatprep.subr.mxu0 %v165
    %211 = vmatpush1.msra.mxu0 %v164
    %212 = vmatprep.subr.mxu0 %v168
    %213 = vmatpush1.msra.mxu0 %v167
    %214 = vmatprep.subr.mxu0 %v171
    %215 = vmatpush1.msra.mxu0 %v170
    %216 = vmatprep.subr.mxu0 %v174
    %217 = vmatpush1.msra.mxu0 %v173
    %218 = vmatprep.subr.mxu0 %v177
    %219 = vmatpush1.msra.mxu0 %v176
    %220 = vmatprep.subr.mxu0 %v180
    %221 = vmatpush1.msra.mxu0 %v179
    %222 = vmatprep.subr.mxu0 %v183
    %223 = vmatpush1.msra.mxu0 %v182
    %224 = vmatprep.subr.mxu0 %v186
    %225 = vmatpush1.msra.mxu0 %v185
    %226 = vmatprep.subr.mxu0 %v189
    %227 = vmatpush1.msra.mxu0 %v188
    %228 = vmatprep.subr.mxu0 %v192
    %229 = vmatpush1.msra.mxu0 %v191
    %230 = vmatprep.subr.mxu0 %v195
    %231 = vmatpush1.msra.mxu0 %v194
    %232 = vmatprep.subr.mxu0 %v198
    %233 = vmatpush1.msra.mxu0 %v197
    %234 = vmatprep.subr.mxu0 %v201
    %235 = vmatpush1.msra.mxu0 %v200
    %236 = vmatprep.subr.mxu0 %v204
    %237 = vmatpush1.msra.mxu0 %v203
    %238 = vmatprep.subr.mxu0 0.0
    %239 = vmatpush1.msra.mxu0 0.0
    %240 = vmatprep.subr.mxu0 0.0
    %241 = vmatpush1.msra.mxu0 0.0
    %242 = vmatprep.subr.mxu0 0.0
    %243 = vmatpush1.msra.mxu0 0.0
    %244 = vmatprep.subr.mxu0 0.0
    %245 = vmatpush1.msra.mxu0 0.0
    %246 = vmatprep.subr.mxu0 0.0
    %247 = vmatpush1.msra.mxu0 0.0
    %248 = vmatprep.subr.mxu0 0.0
    %249 = vmatpush1.msra.mxu0 0.0
    %250 = vmatprep.subr.mxu0 0.0
    %251 = vmatpush1.msra.mxu0 0.0
    %252 = vmatprep.subr.mxu0 0.0
    %253 = vmatpush1.msra.mxu0 0.0
    %254 = vmatprep.subr.mxu0 0.0
    %255 = vmatpush1.msra.mxu0 0.0
    %256 = vmatprep.subr.mxu0 0.0
    %257 = vmatpush1.msra.mxu0 0.0
    %258 = vmatprep.subr.mxu0 0.0
    %259 = vmatpush1.msra.mxu0 0.0
    %260 = vmatprep.subr.mxu0 0.0
    %261 = vmatpush1.msra.mxu0 0.0
    %262 = vmatprep.subr.mxu0 0.0
    %263 = vmatpush1.msra.mxu0 0.0
    %264 = vmatprep.subr.mxu0 0.0
    %265 = vmatpush1.msra.mxu0 0.0
    %266 = vmatprep.subr.mxu0 0.0
    %267 = vmatpush1.msra.mxu0 0.0
    %268 = vmatprep.subr.mxu0 0.0
    %269 = vmatpush1.msra.mxu0 0.0
    %270 = vmatprep.mubr.f32.mxu0 0.0
    %271 = vmatmul.mubr.f32.gmra.mrb[0].mxu0 %v109
    %v272 = vpop.f32.mrb[0].mxu0
    %v273 = vadd.f32 0.0, %v272
    %v274 = vpop.f32.mrb[0].mxu0
    %v275 = vadd.f32 0.0, %v274
    %276 = vdwg.mxu0
    %277 = vmatprep.subr.mxu0 0.0
    %278 = vmatpush1.msra.mxu0 %v160
    %279 = vmatprep.subr.mxu0 0.0
    %280 = vmatpush1.msra.mxu0 %v163
    %281 = vmatprep.subr.mxu0 0.0
    %282 = vmatpush1.msra.mxu0 %v166
    %283 = vmatprep.subr.mxu0 0.0
    %284 = vmatpush1.msra.mxu0 %v169
    %285 = vmatprep.subr.mxu0 0.0
    %286 = vmatpush1.msra.mxu0 %v172
    %287 = vmatprep.subr.mxu0 0.0
    %288 = vmatpush1.msra.mxu0 %v175
    %289 = vmatprep.subr.mxu0 0.0
    %290 = vmatpush1.msra.mxu0 %v178
    %291 = vmatprep.subr.mxu0 0.0
    %292 = vmatpush1.msra.mxu0 %v181
    %293 = vmatprep.subr.mxu0 0.0
    %294 = vmatpush1.msra.mxu0 %v184
    %295 = vmatprep.subr.mxu0 0.0
    %296 = vmatpush1.msra.mxu0 %v187
    %297 = vmatprep.subr.mxu0 0.0
    %298 = vmatpush1.msra.mxu0 %v190
    %299 = vmatprep.subr.mxu0 0.0
    %300 = vmatpush1.msra.mxu0 %v193
    %301 = vmatprep.subr.mxu0 0.0
    %302 = vmatpush1.msra.mxu0 %v196
    %303 = vmatprep.subr.mxu0 0.0
    %304 = vmatpush1.msra.mxu0 %v199
    %305 = vmatprep.subr.mxu0 0.0
    %306 = vmatpush1.msra.mxu0 %v202
    %307 = vmatprep.subr.mxu0 0.0
    %308 = vmatpush1.msra.mxu0 %v205
    %309 = vmatprep.subr.mxu0 0.0
    %310 = vmatpush1.msra.mxu0 0.0
    %311 = vmatprep.subr.mxu0 0.0
    %312 = vmatpush1.msra.mxu0 0.0
    %313 = vmatprep.subr.mxu0 0.0
    %314 = vmatpush1.msra.mxu0 0.0
    %315 = vmatprep.subr.mxu0 0.0
    %316 = vmatpush1.msra.mxu0 0.0
    %317 = vmatprep.subr.mxu0 0.0
    %318 = vmatpush1.msra.mxu0 0.0
    %319 = vmatprep.subr.mxu0 0.0
    %320 = vmatpush1.msra.mxu0 0.0
    %321 = vmatprep.subr.mxu0 0.0
    %322 = vmatpush1.msra.mxu0 0.0
    %323 = vmatprep.subr.mxu0 0.0
    %324 = vmatpush1.msra.mxu0 0.0
    %325 = vmatprep.subr.mxu0 0.0
    %326 = vmatpush1.msra.mxu0 0.0
    %327 = vmatprep.subr.mxu0 0.0
    %328 = vmatpush1.msra.mxu0 0.0
    %329 = vmatprep.subr.mxu0 0.0
    %330 = vmatpush1.msra.mxu0 0.0
    %331 = vmatprep.subr.mxu0 0.0
    %332 = vmatpush1.msra.mxu0 0.0
    %333 = vmatprep.subr.mxu0 0.0
    %334 = vmatpush1.msra.mxu0 0.0
    %335 = vmatprep.subr.mxu0 0.0
    %336 = vmatpush1.msra.mxu0 0.0
    %337 = vmatprep.subr.mxu0 0.0
    %338 = vmatpush1.msra.mxu0 0.0
    %339 = vmatprep.subr.mxu0 0.0
    %340 = vmatpush1.msra.mxu0 0.0
    %341 = vmatprep.mubr.f32.mxu0 0.0
    %342 = vmatmul.mubr.f32.gmra.mrb[0].mxu0 %v109
    %v343 = vpop.f32.mrb[0].mxu0
    %v344 = vadd.f32 0.0, %v343
    %v345 = vpop.f32.mrb[0].mxu0
    %346 = vdwg.mxu0
    %347 = vmatprep.subr.mxu0 %v111
    %348 = vmatpush1.msra.mxu0 %v110
    %349 = vmatprep.subr.mxu0 %v114
    %350 = vmatpush1.msra.mxu0 %v113
    %351 = vmatprep.subr.mxu0 %v117
    %352 = vmatpush1.msra.mxu0 %v116
    %353 = vmatprep.subr.mxu0 %v120
    %354 = vmatpush1.msra.mxu0 %v119
    %355 = vmatprep.subr.mxu0 %v123
    %356 = vmatpush1.msra.mxu0 %v122
    %357 = vmatprep.subr.mxu0 %v126
    %358 = vmatpush1.msra.mxu0 %v125
    %359 = vmatprep.subr.mxu0 %v129
    %360 = vmatpush1.msra.mxu0 %v128
    %361 = vmatprep.subr.mxu0 %v132
    %362 = vmatpush1.msra.mxu0 %v131
    %363 = vmatprep.subr.mxu0 %v135
    %364 = vmatpush1.msra.mxu0 %v134
    %365 = vmatprep.subr.mxu0 %v138
    %366 = vmatpush1.msra.mxu0 %v137
    %367 = vmatprep.subr.mxu0 %v141
    %368 = vmatpush1.msra.mxu0 %v140
    %369 = vmatprep.subr.mxu0 %v144
    %370 = vmatpush1.msra.mxu0 %v143
    %371 = vmatprep.subr.mxu0 %v147
    %372 = vmatpush1.msra.mxu0 %v146
    %373 = vmatprep.subr.mxu0 %v150
    %374 = vmatpush1.msra.mxu0 %v149
    %375 = vmatprep.subr.mxu0 %v153
    %376 = vmatpush1.msra.mxu0 %v152
    %377 = vmatprep.subr.mxu0 %v156
    %378 = vmatpush1.msra.mxu0 %v155
    %379 = vmatprep.subr.mxu0 0.0
    %380 = vmatpush1.msra.mxu0 0.0
    %381 = vmatprep.subr.mxu0 0.0
    %382 = vmatpush1.msra.mxu0 0.0
    %383 = vmatprep.subr.mxu0 0.0
    %384 = vmatpush1.msra.mxu0 0.0
    %385 = vmatprep.subr.mxu0 0.0
    %386 = vmatpush1.msra.mxu0 0.0
    %387 = vmatprep.subr.mxu0 0.0
    %388 = vmatpush1.msra.mxu0 0.0
    %389 = vmatprep.subr.mxu0 0.0
    %390 = vmatpush1.msra.mxu0 0.0
    %391 = vmatprep.subr.mxu0 0.0
    %392 = vmatpush1.msra.mxu0 0.0
    %393 = vmatprep.subr.mxu0 0.0
    %394 = vmatpush1.msra.mxu0 0.0
    %395 = vmatprep.subr.mxu0 0.0
    %396 = vmatpush1.msra.mxu0 0.0
    %397 = vmatprep.subr.mxu0 0.0
    %398 = vmatpush1.msra.mxu0 0.0
    %399 = vmatprep.subr.mxu0 0.0
    %400 = vmatpush1.msra.mxu0 0.0
    %401 = vmatprep.subr.mxu0 0.0
    %402 = vmatpush1.msra.mxu0 0.0
    %403 = vmatprep.subr.mxu0 0.0
    %404 = vmatpush1.msra.mxu0 0.0
    %405 = vmatprep.subr.mxu0 0.0
    %406 = vmatpush1.msra.mxu0 0.0
    %407 = vmatprep.subr.mxu0 0.0
    %408 = vmatpush1.msra.mxu0 0.0
    %409 = vmatprep.subr.mxu0 0.0
    %410 = vmatpush1.msra.mxu0 0.0
    %411 = vmatprep.mubr.f32.mxu0 0.0
    %412 = vmatmul.mubr.f32.gmra.mrb[0].mxu0 %v108
    %v413 = vpop.f32.mrb[0].mxu0
    %v414 = vadd.f32 %v273, %v413
    %v415 = vpop.f32.mrb[0].mxu0
    %v416 = vadd.f32 %v275, %v415
    %417 = vdwg.mxu0
    %418 = vmatprep.subr.mxu0 0.0
    %419 = vmatpush1.msra.mxu0 %v112
    %420 = vmatprep.subr.mxu0 0.0
    %421 = vmatpush1.msra.mxu0 %v115
    %422 = vmatprep.subr.mxu0 0.0
    %423 = vmatpush1.msra.mxu0 %v118
    %424 = vmatprep.subr.mxu0 0.0
    %425 = vmatpush1.msra.mxu0 %v121
    %426 = vmatprep.subr.mxu0 0.0
    %427 = vmatpush1.msra.mxu0 %v124
    %428 = vmatprep.subr.mxu0 0.0
    %429 = vmatpush1.msra.mxu0 %v127
    %430 = vmatprep.subr.mxu0 0.0
    %431 = vmatpush1.msra.mxu0 %v130
    %432 = vmatprep.subr.mxu0 0.0
    %433 = vmatpush1.msra.mxu0 %v133
    %434 = vmatprep.subr.mxu0 0.0
    %435 = vmatpush1.msra.mxu0 %v136
    %436 = vmatprep.subr.mxu0 0.0
    %437 = vmatpush1.msra.mxu0 %v139
    %438 = vmatprep.subr.mxu0 0.0
    %439 = vmatpush1.msra.mxu0 %v142
    %440 = vmatprep.subr.mxu0 0.0
    %441 = vmatpush1.msra.mxu0 %v145
    %442 = vmatprep.subr.mxu0 0.0
    %443 = vmatpush1.msra.mxu0 %v148
    %444 = vmatprep.subr.mxu0 0.0
    %445 = vmatpush1.msra.mxu0 %v151
    %446 = vmatprep.subr.mxu0 0.0
    %447 = vmatpush1.msra.mxu0 %v154
    %448 = vmatprep.subr.mxu0 0.0
    %449 = vmatpush1.msra.mxu0 %v157
    %450 = vmatprep.subr.mxu0 0.0
    %451 = vmatpush1.msra.mxu0 0.0
    %452 = vmatprep.subr.mxu0 0.0
    %453 = vmatpush1.msra.mxu0 0.0
    %454 = vmatprep.subr.mxu0 0.0
    %455 = vmatpush1.msra.mxu0 0.0
    %456 = vmatprep.subr.mxu0 0.0
    %457 = vmatpush1.msra.mxu0 0.0
    %458 = vmatprep.subr.mxu0 0.0
    %459 = vmatpush1.msra.mxu0 0.0
    %460 = vmatprep.subr.mxu0 0.0
    %461 = vmatpush1.msra.mxu0 0.0
    %462 = vmatprep.subr.mxu0 0.0
    %463 = vmatpush1.msra.mxu0 0.0
    %464 = vmatprep.subr.mxu0 0.0
    %465 = vmatpush1.msra.mxu0 0.0
    %466 = vmatprep.subr.mxu0 0.0
    %467 = vmatpush1.msra.mxu0 0.0
    %468 = vmatprep.subr.mxu0 0.0
    %469 = vmatpush1.msra.mxu0 0.0
    %470 = vmatprep.subr.mxu0 0.0
    %471 = vmatpush1.msra.mxu0 0.0
    %472 = vmatprep.subr.mxu0 0.0
    %473 = vmatpush1.msra.mxu0 0.0
    %474 = vmatprep.subr.mxu0 0.0
    %475 = vmatpush1.msra.mxu0 0.0
    %476 = vmatprep.subr.mxu0 0.0
    %477 = vmatpush1.msra.mxu0 0.0
    %478 = vmatprep.subr.mxu0 0.0
    %479 = vmatpush1.msra.mxu0 0.0
    %480 = vmatprep.subr.mxu0 0.0
    %481 = vmatpush1.msra.mxu0 0.0
    %482 = vmatprep.mubr.f32.mxu0 0.0
    %483 = vmatmul.mubr.f32.gmra.mrb[0].mxu0 %v108
    %v484 = vpop.f32.mrb[0].mxu0
    %v485 = vadd.f32 %v344, %v484
    %v486 = vpop.f32.mrb[0].mxu0
    %487 = vdwg.mxu0
    %v488 = vld [vmem:[%s4] sm:$0x7]
    %v490 = vlaneseq
    %v491 = vshrl.u32 %v490, 7
    %v492 = vsub.s32 0, %v491
    %v493 = vrot.slane %v488, %v492
    %v494 = vlaneseq
    %v495 = vshrl.u32 %v494, 7
    %v496 = vsub.s32 1, %v495
    %v497 = vrot.slane %v488, %v496
    %v498 = vlaneseq
    %v499 = vshrl.u32 %v498, 7
    %v500 = vsub.s32 2, %v499
    %v501 = vrot.slane %v488, %v500
    %v505 = vadd.f32 %v414, %v493
    %v506 = vadd.f32 %v416, %v497
    %v507 = vadd.f32 %v485, %v501
    %v508 = vxor.u32 %v505, 2147483648
    %v509 = vxor.u32 %v506, 2147483648
    %v510 = vxor.u32 %v507, 2147483648
    %v511 = vmul.f32 %v508, 1.442695
    %v512 = vpow.pop %v511
    %v513 = vmul.f32 %v509, 1.442695
    %v514 = vpow.pop %v513
    %v515 = vmul.f32 %v510, 1.442695
    %v516 = vpow.pop %v515
    %v517 = vadd.f32 %v512, 1.0
    %v518 = vadd.f32 %v514, 1.0
    %v519 = vadd.f32 %v516, 1.0
    %v520 = vrcp.pop %v517
    %v521 = vmul.f32 1.0, %v520
    %v522 = vrcp.pop %v518
    %v523 = vmul.f32 1.0, %v522
    %v524 = vrcp.pop %v519
    %v525 = vmul.f32 1.0, %v524
    %v526 = vld [vmem:[#allocation10] sm:$0xff]
    %v527 = vld [vmem:[#allocation10 + $0x8] sm:$0xff]
    %v528 = vld [vmem:[#allocation10 + $0x10] sm:$0xff]
    %v529 = vld [vmem:[#allocation10 + $0x18] sm:$0xff]
    %v530 = vld [vmem:[#allocation10 + $0x20] sm:$0xff]
    %v531 = vld [vmem:[#allocation10 + $0x28] sm:$0xff]
    %v532 = vld [vmem:[#allocation10 + $0x30] sm:$0xff]
    %v533 = vld [vmem:[#allocation10 + $0x38] sm:$0xff]
    %v534 = vld [vmem:[#allocation10 + $0x40] sm:$0xff]
    %v535 = vld [vmem:[#allocation10 + $0x48] sm:$0xff]
    %v536 = vld [vmem:[#allocation10 + $0x50] sm:$0xff]
    %v537 = vld [vmem:[#allocation10 + $0x58] sm:$0xff]
    %v538 = vld [vmem:[#allocation10 + $0x60] sm:$0xff]
    %v539 = vld [vmem:[#allocation10 + $0x68] sm:$0xff]
    %v540 = vld [vmem:[#allocation10 + $0x70] sm:$0xff]
    %v541 = vld [vmem:[#allocation10 + $0x78] sm:$0xff]
    %v542 = vmul.f32 %v521, %v109
    %v543 = vld [vmem:[#allocation11] sm:$0xff]
    %v544 = vld [vmem:[#allocation11 + $0x8] sm:$0xff]
    %v545 = vld [vmem:[#allocation11 + $0x10] sm:$0xff]
    %v546 = vld [vmem:[#allocation11 + $0x18] sm:$0xff]
    %v547 = vld [vmem:[#allocation11 + $0x20] sm:$0xff]
    %v548 = vld [vmem:[#allocation11 + $0x28] sm:$0xff]
    %v549 = vld [vmem:[#allocation11 + $0x30] sm:$0xff]
    %v550 = vld [vmem:[#allocation11 + $0x38] sm:$0xff]
    %v551 = vld [vmem:[#allocation11 + $0x40] sm:$0xff]
    %v552 = vld [vmem:[#allocation11 + $0x48] sm:$0xff]
    %v553 = vld [vmem:[#allocation11 + $0x50] sm:$0xff]
    %v554 = vld [vmem:[#allocation11 + $0x58] sm:$0xff]
    %v555 = vld [vmem:[#allocation11 + $0x60] sm:$0xff]
    %v556 = vld [vmem:[#allocation11 + $0x68] sm:$0xff]
    %v557 = vld [vmem:[#allocation11 + $0x70] sm:$0xff]
    %v558 = vld [vmem:[#allocation11 + $0x78] sm:$0xff]
    %559 = vmatprep.subr.mxu0 0.0
    %560 = vmatpush1.msra.mxu0 %v543
    %561 = vmatprep.subr.mxu0 0.0
    %562 = vmatpush1.msra.mxu0 %v544
    %563 = vmatprep.subr.mxu0 0.0
    %564 = vmatpush1.msra.mxu0 %v545
    %565 = vmatprep.subr.mxu0 0.0
    %566 = vmatpush1.msra.mxu0 %v546
    %567 = vmatprep.subr.mxu0 0.0
    %568 = vmatpush1.msra.mxu0 %v547
    %569 = vmatprep.subr.mxu0 0.0
    %570 = vmatpush1.msra.mxu0 %v548
    %571 = vmatprep.subr.mxu0 0.0
    %572 = vmatpush1.msra.mxu0 %v549
    %573 = vmatprep.subr.mxu0 0.0
    %574 = vmatpush1.msra.mxu0 %v550
    %575 = vmatprep.subr.mxu0 0.0
    %576 = vmatpush1.msra.mxu0 %v551
    %577 = vmatprep.subr.mxu0 0.0
    %578 = vmatpush1.msra.mxu0 %v552
    %579 = vmatprep.subr.mxu0 0.0
    %580 = vmatpush1.msra.mxu0 %v553
    %581 = vmatprep.subr.mxu0 0.0
    %582 = vmatpush1.msra.mxu0 %v554
    %583 = vmatprep.subr.mxu0 0.0
    %584 = vmatpush1.msra.mxu0 %v555
    %585 = vmatprep.subr.mxu0 0.0
    %586 = vmatpush1.msra.mxu0 %v556
    %587 = vmatprep.subr.mxu0 0.0
    %588 = vmatpush1.msra.mxu0 %v557
    %589 = vmatprep.subr.mxu0 0.0
    %590 = vmatpush1.msra.mxu0 %v558
    %591 = vmatprep.subr.mxu0 0.0
    %592 = vmatpush1.msra.mxu0 0.0
    %593 = vmatprep.subr.mxu0 0.0
    %594 = vmatpush1.msra.mxu0 0.0
    %595 = vmatprep.subr.mxu0 0.0
    %596 = vmatpush1.msra.mxu0 0.0
    %597 = vmatprep.subr.mxu0 0.0
    %598 = vmatpush1.msra.mxu0 0.0
    %599 = vmatprep.subr.mxu0 0.0
    %600 = vmatpush1.msra.mxu0 0.0
    %601 = vmatprep.subr.mxu0 0.0
    %602 = vmatpush1.msra.mxu0 0.0
    %603 = vmatprep.subr.mxu0 0.0
    %604 = vmatpush1.msra.mxu0 0.0
    %605 = vmatprep.subr.mxu0 0.0
    %606 = vmatpush1.msra.mxu0 0.0
    %607 = vmatprep.subr.mxu0 0.0
    %608 = vmatpush1.msra.mxu0 0.0
    %609 = vmatprep.subr.mxu0 0.0
    %610 = vmatpush1.msra.mxu0 0.0
    %611 = vmatprep.subr.mxu0 0.0
    %612 = vmatpush1.msra.mxu0 0.0
    %613 = vmatprep.subr.mxu0 0.0
    %614 = vmatpush1.msra.mxu0 0.0
    %615 = vmatprep.subr.mxu0 0.0
    %616 = vmatpush1.msra.mxu0 0.0
    %617 = vmatprep.subr.mxu0 0.0
    %618 = vmatpush1.msra.mxu0 0.0
    %619 = vmatprep.subr.mxu0 0.0
    %620 = vmatpush1.msra.mxu0 0.0
    %621 = vmatprep.subr.mxu0 0.0
    %622 = vmatpush1.msra.mxu0 0.0
    %623 = vmatprep.mubr.f32.mxu0 0.0
    %624 = vmatmul.mubr.f32.gmra.mrb[0].mxu0 %v542
    %v625 = vpop.f32.mrb[0].mxu0
    %v626 = vadd.f32 0.0, %v625
    %v627 = vpop.f32.mrb[0].mxu0
    %628 = vdwg.mxu0
    %629 = vmatprep.subr.mxu0 0.0
    %630 = vmatpush1.msra.mxu0 %v526
    %631 = vmatprep.subr.mxu0 0.0
    %632 = vmatpush1.msra.mxu0 %v527
    %633 = vmatprep.subr.mxu0 0.0
    %634 = vmatpush1.msra.mxu0 %v528
    %635 = vmatprep.subr.mxu0 0.0
    %636 = vmatpush1.msra.mxu0 %v529
    %637 = vmatprep.subr.mxu0 0.0
    %638 = vmatpush1.msra.mxu0 %v530
    %639 = vmatprep.subr.mxu0 0.0
    %640 = vmatpush1.msra.mxu0 %v531
    %641 = vmatprep.subr.mxu0 0.0
    %642 = vmatpush1.msra.mxu0 %v532
    %643 = vmatprep.subr.mxu0 0.0
    %644 = vmatpush1.msra.mxu0 %v533
    %645 = vmatprep.subr.mxu0 0.0
    %646 = vmatpush1.msra.mxu0 %v534
    %647 = vmatprep.subr.mxu0 0.0
    %648 = vmatpush1.msra.mxu0 %v535
    %649 = vmatprep.subr.mxu0 0.0
    %650 = vmatpush1.msra.mxu0 %v536
    %651 = vmatprep.subr.mxu0 0.0
    %652 = vmatpush1.msra.mxu0 %v537
    %653 = vmatprep.subr.mxu0 0.0
    %654 = vmatpush1.msra.mxu0 %v538
    %655 = vmatprep.subr.mxu0 0.0
    %656 = vmatpush1.msra.mxu0 %v539
    %657 = vmatprep.subr.mxu0 0.0
    %658 = vmatpush1.msra.mxu0 %v540
    %659 = vmatprep.subr.mxu0 0.0
    %660 = vmatpush1.msra.mxu0 %v541
    %661 = vmatprep.subr.mxu0 0.0
    %662 = vmatpush1.msra.mxu0 0.0
    %663 = vmatprep.subr.mxu0 0.0
    %664 = vmatpush1.msra.mxu0 0.0
    %665 = vmatprep.subr.mxu0 0.0
    %666 = vmatpush1.msra.mxu0 0.0
    %667 = vmatprep.subr.mxu0 0.0
    %668 = vmatpush1.msra.mxu0 0.0
    %669 = vmatprep.subr.mxu0 0.0
    %670 = vmatpush1.msra.mxu0 0.0
    %671 = vmatprep.subr.mxu0 0.0
    %672 = vmatpush1.msra.mxu0 0.0
    %673 = vmatprep.subr.mxu0 0.0
    %674 = vmatpush1.msra.mxu0 0.0
    %675 = vmatprep.subr.mxu0 0.0
    %676 = vmatpush1.msra.mxu0 0.0
    %677 = vmatprep.subr.mxu0 0.0
    %678 = vmatpush1.msra.mxu0 0.0
    %679 = vmatprep.subr.mxu0 0.0
    %680 = vmatpush1.msra.mxu0 0.0
    %681 = vmatprep.subr.mxu0 0.0
    %682 = vmatpush1.msra.mxu0 0.0
    %683 = vmatprep.subr.mxu0 0.0
    %684 = vmatpush1.msra.mxu0 0.0
    %685 = vmatprep.subr.mxu0 0.0
    %686 = vmatpush1.msra.mxu0 0.0
    %687 = vmatprep.subr.mxu0 0.0
    %688 = vmatpush1.msra.mxu0 0.0
    %689 = vmatprep.subr.mxu0 0.0
    %690 = vmatpush1.msra.mxu0 0.0
    %691 = vmatprep.subr.mxu0 0.0
    %692 = vmatpush1.msra.mxu0 0.0
    %693 = vmatprep.mubr.f32.mxu0 0.0
    %694 = vmatmul.mubr.f32.gmra.mrb[0].mxu0 %v108
    %v695 = vpop.f32.mrb[0].mxu0
    %v696 = vadd.f32 %v626, %v695
    %v697 = vpop.f32.mrb[0].mxu0
    %698 = vdwg.mxu0
    %v699 = vld [vmem:[%s7] sm:$0x1]
    %v701 = vlaneseq
    %v702 = vshrl.u32 %v701, 7
    %v703 = vsub.s32 0, %v702
    %v704 = vrot.slane %v699, %v703
    %v706 = vadd.f32 %v696, %v704
    %v707 = vtanh.pop %v706
    %v708 = vmul.f32 %v523, %v109
    %v709 = vmul.f32 %v525, %v707
    %v710 = vadd.f32 %v708, %v709
    %711 = vst [vmem:[#allocation13] sm:$0xff] %v710
    // Predicated region
    $region58: #{tpu_custom_call.1} parent=1 // pred_check
      _
    $region59: #{tpu_custom_call.1} parent=1 // pred_check_branch
      %713 = sbr.rel (0) target = $region61
    $region60: #{tpu_custom_call.1} parent=1 // pred_region
      %s715 = ssub.s32 128, 128
      %716 = vsyncadd [#allocation4], %s715
      %s718 = sshll.u32 [#allocation13], 4
      %s719 = int_to_ptr.vmem [resolvable:$true] %s718
      %721 = dma.vmem_to_hbm [thread:$0]  %s719, 128, %s8, [#allocation4]
    $region61: #{tpu_custom_call.1} parent=1 // pred_fallthru
      _
    // Predicated region
    $region62: #{tpu_custom_call.1} parent=1 // pred_check
      _
    $region63: #{tpu_custom_call.1} parent=1 // pred_check_branch
      %723 = sbr.rel (0) target = $region65
    $region64: #{tpu_custom_call.1} parent=1 // pred_region
      %724 = dma.done [#allocation4], 128
    $region65: #{tpu_custom_call.1} parent=1 // pred_fallthru
      _
    %725 = vsyncpa [#allocation3], 1
    %726 = vsyncpa [#allocation6], 1
    %727 = vsyncpa [#allocation9], 1
    %728 = vsyncpa [#allocation12], 1
    %729 = vsyncpa [#allocation4], 1

</llo_original>
